<compile_context>
chip_gen: v7x
topology: tpu7x:2x2x1
jax: 0.10.0
libtpu: 0.0.40
codegen_flags: <defaults>
</compile_context>

<pallas_src>
import functools

import numpy as np
import jax
import jax.numpy as jnp
from jax import lax
from jax.experimental import pallas as pl
from jax.experimental.pallas import tpu as pltpu

_POOL_STRIDES = (2, 3, 2, 2)
_K = 5
_PAD = 2
_SLOPE = 0.05


def _pool_select_mats(Lc, stride, P, pad_out):
    """One-hot selection matrices (Lc, P + 2*pad_out) for MaxPool1d(k=2, stride).

    Column (pad_out + q) of S0 / S1 picks conv positions q*stride / q*stride+1.
    The first/last `pad_out` columns are all-zero so the pooled output already
    carries the zero 'same'-padding required by the next conv layer.
    """
    width = P + 2 * pad_out
    r = np.arange(Lc)[:, None]
    q = np.arange(width)[None, :] - pad_out
    valid = (q >= 0) & (q < P)
    s0 = ((r == q * stride) & valid).astype(np.float32)
    s1 = ((r == q * stride + 1) & valid).astype(np.float32)
    return jnp.asarray(s0), jnp.asarray(s1)


def _fused_kernel(xp_ref, *refs, conv_lens, K, slope):
    """All four (conv + maxpool + leaky-relu) stages for one batch element."""
    o_ref = refs[-1]
    prefs = refs[:-1]                      # 4 refs per layer: w, b, s0, s1
    a = xp_ref[0]                          # (Ci0, L0 + 2*pad), already zero-padded

    for li, Lc in enumerate(conv_lens):
        w_ref, b_ref, s0_ref, s1_ref = prefs[4 * li:4 * li + 4]
        # im2col: stack the K shifted slices along sublanes -> (K*Ci, Lc).
        # Row order is t*Ci + c, matching the host-side weight reshape.
        patches = jnp.concatenate([a[:, t:t + Lc] for t in range(K)], axis=0)
        # Conv1d (same padding, stride 1) as one MXU matmul + bias.
        conv = jnp.dot(w_ref[...], patches,
                       preferred_element_type=jnp.float32) + b_ref[...]
        # MaxPool1d(k=2, stride=s) via two exact one-hot selection matmuls;
        # the selection matrices also emit the zero padding for the next layer.
        p = jnp.maximum(
            jnp.dot(conv, s0_ref[...], preferred_element_type=jnp.float32),
            jnp.dot(conv, s1_ref[...], preferred_element_type=jnp.float32))
        # LeakyReLU(0.05); zeros (padding columns) stay zero.
        a = jnp.where(p >= 0, p, slope * p)

    o_ref[0] = a.astype(o_ref.dtype)


def gm_model_forward(x, params):
    """Full GMModel forward. x: (B, 1, L) float32 -> (B, 64, L_out)."""
    B, C0, L0 = x.shape
    xp = jnp.pad(x.astype(jnp.float32), ((0, 0), (0, 0), (_PAD, _PAD)))

    flat_params = []
    in_specs = [pl.BlockSpec((1, C0, L0 + 2 * _PAD), lambda i: (i, 0, 0))]
    conv_lens = []
    flops = 0
    bytes_accessed = 4 * xp.size
    n_layers = len(params)
    Lcur = L0
    Co_last = C0
    for li, ((w, b), s) in enumerate(zip(params, _POOL_STRIDES)):
        Co, Ci, K = w.shape
        Lc = Lcur                                  # conv output length (same pad)
        P = (Lc - 2) // s + 1                      # maxpool(k=2, stride=s, pad=0)
        pad_out = _PAD if li < n_layers - 1 else 0
        width = P + 2 * pad_out

        # (Co, Ci, K) -> (Co, K*Ci) with index t*Ci + c (matches im2col order).
        w2 = jnp.transpose(w, (0, 2, 1)).reshape(Co, K * Ci).astype(jnp.float32)
        b2 = b.reshape(Co, 1).astype(jnp.float32)
        s0, s1 = _pool_select_mats(Lc, s, P, pad_out)

        flat_params += [w2, b2, s0, s1]
        in_specs += [pl.BlockSpec(arr.shape, lambda i: (0, 0))
                     for arr in (w2, b2, s0, s1)]
        conv_lens.append(Lc)
        flops += B * (2 * Co * K * Ci * Lc + 2 * 2 * Co * Lc * width)
        bytes_accessed += 4 * (w2.size + b2.size + s0.size + s1.size)
        Lcur = P
        Co_last = Co

    bytes_accessed += 4 * B * Co_last * Lcur
    kernel = functools.partial(_fused_kernel, conv_lens=tuple(conv_lens),
                               K=_K, slope=_SLOPE)

    return pl.pallas_call(
        kernel,
        out_shape=jax.ShapeDtypeStruct((B, Co_last, Lcur), jnp.float32),
        grid=(B,),
        in_specs=in_specs,
        out_specs=pl.BlockSpec((1, Co_last, Lcur), lambda i: (i, 0, 0)),
        compiler_params=pltpu.CompilerParams(
            dimension_semantics=("parallel",)),
        cost_estimate=pl.CostEstimate(
            flops=flops, transcendentals=0, bytes_accessed=bytes_accessed),
    )(xp, *flat_params)


def init_params(key):
    """Deterministic Conv1d params, PyTorch-default-style uniform init."""
    cfgs = [(1, 8, 5), (8, 16, 5), (16, 32, 5), (32, 64, 5)]
    params = []
    for ci, co, k in cfgs:
        key, kw, kb = jax.random.split(key, 3)
        bound = 1.0 / jnp.sqrt(ci * k)
        w = jax.random.uniform(kw, (co, ci, k), jnp.float32, -bound, bound)
        b = jax.random.uniform(kb, (co,), jnp.float32, -bound, bound)
        params.append((w, b))
    return params


def _reference_forward(x, params):
    """Pure-JAX reference (lax.conv + reduce_window) matching PyTorch semantics."""
    for (w, b), s in zip(params, _POOL_STRIDES):
        y = lax.conv_general_dilated(
            x, w, window_strides=(1,), padding=[(2, 2)],
            dimension_numbers=("NCH", "OIH", "NCH"))
        y = y + b[None, :, None]
        y = lax.reduce_window(y, -jnp.inf, lax.max,
                              window_dimensions=(1, 1, 2),
                              window_strides=(1, 1, s),
                              padding="VALID")
        x = jnp.where(y >= 0, y, _SLOPE * y)
    return x


if __name__ == "__main__":
    key = jax.random.PRNGKey(0)
    k_x, k_p = jax.random.split(key)

    B, C, L = 2, 1, 96          # (B, 1, 96) -> (B, 64, 4)
    x = jax.random.normal(k_x, (B, C, L), jnp.float32)
    params = init_params(k_p)

    out = gm_model_forward(x, params)
    out = jax.block_until_ready(out)

    ref = jax.block_until_ready(_reference_forward(x, params))
    assert out.shape == (B, 64, 4), out.shape
    assert jnp.allclose(out, ref, atol=1e-4, rtol=1e-4), (
        float(jnp.max(jnp.abs(out - ref))))

    print("KERNEL_OK")
</pallas_src>

<mosaic_0001>
module attributes {stable_mosaic.version = 11 : i64} {
  func.func @_fused_kernel(%arg0: i32, %arg1: memref<1x1x100xf32, #tpu.memory_space<vmem>>, %arg2: memref<8x5xf32, #tpu.memory_space<vmem>>, %arg3: memref<8x1xf32, #tpu.memory_space<vmem>>, %arg4: memref<96x52xf32, #tpu.memory_space<vmem>>, %arg5: memref<96x52xf32, #tpu.memory_space<vmem>>, %arg6: memref<16x40xf32, #tpu.memory_space<vmem>>, %arg7: memref<16x1xf32, #tpu.memory_space<vmem>>, %arg8: memref<48x20xf32, #tpu.memory_space<vmem>>, %arg9: memref<48x20xf32, #tpu.memory_space<vmem>>, %arg10: memref<32x80xf32, #tpu.memory_space<vmem>>, %arg11: memref<32x1xf32, #tpu.memory_space<vmem>>, %arg12: memref<16x12xf32, #tpu.memory_space<vmem>>, %arg13: memref<16x12xf32, #tpu.memory_space<vmem>>, %arg14: memref<64x160xf32, #tpu.memory_space<vmem>>, %arg15: memref<64x1xf32, #tpu.memory_space<vmem>>, %arg16: memref<8x4xf32, #tpu.memory_space<vmem>>, %arg17: memref<8x4xf32, #tpu.memory_space<vmem>>, %arg18: memref<1x64x4xf32, #tpu.memory_space<vmem>>) attributes {dimension_semantics = [#tpu.dimension_semantics<parallel>], iteration_bounds = array<i64: 2>, scalar_prefetch = 0 : i64, scratch_operands = 0 : i64, tpu.core_type = #tpu.core_type<tc>, window_params = [{transform_indices = @transform_0, window_bounds = array<i64: 1, 1, 100>}, {pipeline_mode = #tpu.pipeline_mode<synchronous>, transform_indices = @transform_1, window_bounds = array<i64: 8, 5>}, {pipeline_mode = #tpu.pipeline_mode<synchronous>, transform_indices = @transform_2, window_bounds = array<i64: 8, 1>}, {pipeline_mode = #tpu.pipeline_mode<synchronous>, transform_indices = @transform_3, window_bounds = array<i64: 96, 52>}, {pipeline_mode = #tpu.pipeline_mode<synchronous>, transform_indices = @transform_4, window_bounds = array<i64: 96, 52>}, {pipeline_mode = #tpu.pipeline_mode<synchronous>, transform_indices = @transform_5, window_bounds = array<i64: 16, 40>}, {pipeline_mode = #tpu.pipeline_mode<synchronous>, transform_indices = @transform_6, window_bounds = array<i64: 16, 1>}, {pipeline_mode = #tpu.pipeline_mode<synchronous>, transform_indices = @transform_7, window_bounds = array<i64: 48, 20>}, {pipeline_mode = #tpu.pipeline_mode<synchronous>, transform_indices = @transform_8, window_bounds = array<i64: 48, 20>}, {pipeline_mode = #tpu.pipeline_mode<synchronous>, transform_indices = @transform_9, window_bounds = array<i64: 32, 80>}, {pipeline_mode = #tpu.pipeline_mode<synchronous>, transform_indices = @transform_10, window_bounds = array<i64: 32, 1>}, {pipeline_mode = #tpu.pipeline_mode<synchronous>, transform_indices = @transform_11, window_bounds = array<i64: 16, 12>}, {pipeline_mode = #tpu.pipeline_mode<synchronous>, transform_indices = @transform_12, window_bounds = array<i64: 16, 12>}, {pipeline_mode = #tpu.pipeline_mode<synchronous>, transform_indices = @transform_13, window_bounds = array<i64: 64, 160>}, {pipeline_mode = #tpu.pipeline_mode<synchronous>, transform_indices = @transform_14, window_bounds = array<i64: 64, 1>}, {pipeline_mode = #tpu.pipeline_mode<synchronous>, transform_indices = @transform_15, window_bounds = array<i64: 8, 4>}, {pipeline_mode = #tpu.pipeline_mode<synchronous>, transform_indices = @transform_16, window_bounds = array<i64: 8, 4>}, {transform_indices = @transform_17, window_bounds = array<i64: 1, 64, 4>}]} {
    %c0 = arith.constant 0 : index
    %c0_0 = arith.constant 0 : index
    %c0_1 = arith.constant 0 : index
    %0 = vector.load %arg1[%c0, %c0_0, %c0_1] : memref<1x1x100xf32, #tpu.memory_space<vmem>>, vector<1x1x100xf32>
    %1 = vector.shape_cast %0 : vector<1x1x100xf32> to vector<1x100xf32>
    %2 = vector.extract_strided_slice %1 {offsets = [0, 0], sizes = [1, 96], strides = [1, 1]} : vector<1x100xf32> to vector<1x96xf32>
    %3 = vector.extract_strided_slice %1 {offsets = [0, 1], sizes = [1, 96], strides = [1, 1]} : vector<1x100xf32> to vector<1x96xf32>
    %4 = vector.extract_strided_slice %1 {offsets = [0, 2], sizes = [1, 96], strides = [1, 1]} : vector<1x100xf32> to vector<1x96xf32>
    %5 = vector.extract_strided_slice %1 {offsets = [0, 3], sizes = [1, 96], strides = [1, 1]} : vector<1x100xf32> to vector<1x96xf32>
    %6 = vector.extract_strided_slice %1 {offsets = [0, 4], sizes = [1, 96], strides = [1, 1]} : vector<1x100xf32> to vector<1x96xf32>
    %7 = tpu.concatenate %2, %3, %4, %5, %6 in 0 : vector<1x96xf32>, vector<1x96xf32>, vector<1x96xf32>, vector<1x96xf32>, vector<1x96xf32> -> vector<5x96xf32>
    %c0_2 = arith.constant 0 : index
    %c0_3 = arith.constant 0 : index
    %8 = vector.load %arg2[%c0_2, %c0_3] : memref<8x5xf32, #tpu.memory_space<vmem>>, vector<8x5xf32>
    %cst = arith.constant dense<0.000000e+00> : vector<8x96xf32>
    %9 = tpu.matmul %8, %7, %cst {dimension_numbers = #tpu.dot_dimension_numbers<[1], [0], [0], [1], [0, 0, 1, 1], [], []>} : vector<8x5xf32>, vector<5x96xf32>, vector<8x96xf32> -> vector<8x96xf32>
    %c0_4 = arith.constant 0 : index
    %c0_5 = arith.constant 0 : index
    %10 = vector.load %arg3[%c0_4, %c0_5] : memref<8x1xf32, #tpu.memory_space<vmem>>, vector<8x1xf32>
    %11 = vector.broadcast %10 : vector<8x1xf32> to vector<8x96xf32>
    %12 = arith.addf %9, %11 : vector<8x96xf32>
    %c0_6 = arith.constant 0 : index
    %c0_7 = arith.constant 0 : index
    %13 = vector.load %arg4[%c0_6, %c0_7] : memref<96x52xf32, #tpu.memory_space<vmem>>, vector<96x52xf32>
    %cst_8 = arith.constant dense<0.000000e+00> : vector<8x52xf32>
    %14 = tpu.matmul %12, %13, %cst_8 {dimension_numbers = #tpu.dot_dimension_numbers<[1], [0], [0], [1], [0, 0, 1, 1], [], []>} : vector<8x96xf32>, vector<96x52xf32>, vector<8x52xf32> -> vector<8x52xf32>
    %c0_9 = arith.constant 0 : index
    %c0_10 = arith.constant 0 : index
    %15 = vector.load %arg5[%c0_9, %c0_10] : memref<96x52xf32, #tpu.memory_space<vmem>>, vector<96x52xf32>
    %cst_11 = arith.constant dense<0.000000e+00> : vector<8x52xf32>
    %16 = tpu.matmul %12, %15, %cst_11 {dimension_numbers = #tpu.dot_dimension_numbers<[1], [0], [0], [1], [0, 0, 1, 1], [], []>} : vector<8x96xf32>, vector<96x52xf32>, vector<8x52xf32> -> vector<8x52xf32>
    %17 = arith.maximumf %14, %16 : vector<8x52xf32>
    %cst_12 = arith.constant 0.000000e+00 : f32
    %18 = vector.broadcast %cst_12 : f32 to vector<8x52xf32>
    %19 = arith.cmpf oge, %17, %18 : vector<8x52xf32>
    %cst_13 = arith.constant 5.000000e-02 : f32
    %20 = vector.broadcast %cst_13 : f32 to vector<8x52xf32>
    %21 = arith.mulf %20, %17 : vector<8x52xf32>
    %22 = arith.select %19, %17, %21 : vector<8x52xi1>, vector<8x52xf32>
    %23 = vector.extract_strided_slice %22 {offsets = [0, 0], sizes = [8, 48], strides = [1, 1]} : vector<8x52xf32> to vector<8x48xf32>
    %24 = vector.extract_strided_slice %22 {offsets = [0, 1], sizes = [8, 48], strides = [1, 1]} : vector<8x52xf32> to vector<8x48xf32>
    %25 = vector.extract_strided_slice %22 {offsets = [0, 2], sizes = [8, 48], strides = [1, 1]} : vector<8x52xf32> to vector<8x48xf32>
    %26 = vector.extract_strided_slice %22 {offsets = [0, 3], sizes = [8, 48], strides = [1, 1]} : vector<8x52xf32> to vector<8x48xf32>
    %27 = vector.extract_strided_slice %22 {offsets = [0, 4], sizes = [8, 48], strides = [1, 1]} : vector<8x52xf32> to vector<8x48xf32>
    %28 = tpu.concatenate %23, %24, %25, %26, %27 in 0 : vector<8x48xf32>, vector<8x48xf32>, vector<8x48xf32>, vector<8x48xf32>, vector<8x48xf32> -> vector<40x48xf32>
    %c0_14 = arith.constant 0 : index
    %c0_15 = arith.constant 0 : index
    %29 = vector.load %arg6[%c0_14, %c0_15] : memref<16x40xf32, #tpu.memory_space<vmem>>, vector<16x40xf32>
    %cst_16 = arith.constant dense<0.000000e+00> : vector<16x48xf32>
    %30 = tpu.matmul %29, %28, %cst_16 {dimension_numbers = #tpu.dot_dimension_numbers<[1], [0], [0], [1], [0, 0, 1, 1], [], []>} : vector<16x40xf32>, vector<40x48xf32>, vector<16x48xf32> -> vector<16x48xf32>
    %c0_17 = arith.constant 0 : index
    %c0_18 = arith.constant 0 : index
    %31 = vector.load %arg7[%c0_17, %c0_18] : memref<16x1xf32, #tpu.memory_space<vmem>>, vector<16x1xf32>
    %32 = vector.broadcast %31 : vector<16x1xf32> to vector<16x48xf32>
    %33 = arith.addf %30, %32 : vector<16x48xf32>
    %c0_19 = arith.constant 0 : index
    %c0_20 = arith.constant 0 : index
    %34 = vector.load %arg8[%c0_19, %c0_20] : memref<48x20xf32, #tpu.memory_space<vmem>>, vector<48x20xf32>
    %cst_21 = arith.constant dense<0.000000e+00> : vector<16x20xf32>
    %35 = tpu.matmul %33, %34, %cst_21 {dimension_numbers = #tpu.dot_dimension_numbers<[1], [0], [0], [1], [0, 0, 1, 1], [], []>} : vector<16x48xf32>, vector<48x20xf32>, vector<16x20xf32> -> vector<16x20xf32>
    %c0_22 = arith.constant 0 : index
    %c0_23 = arith.constant 0 : index
    %36 = vector.load %arg9[%c0_22, %c0_23] : memref<48x20xf32, #tpu.memory_space<vmem>>, vector<48x20xf32>
    %cst_24 = arith.constant dense<0.000000e+00> : vector<16x20xf32>
    %37 = tpu.matmul %33, %36, %cst_24 {dimension_numbers = #tpu.dot_dimension_numbers<[1], [0], [0], [1], [0, 0, 1, 1], [], []>} : vector<16x48xf32>, vector<48x20xf32>, vector<16x20xf32> -> vector<16x20xf32>
    %38 = arith.maximumf %35, %37 : vector<16x20xf32>
    %cst_25 = arith.constant 0.000000e+00 : f32
    %39 = vector.broadcast %cst_25 : f32 to vector<16x20xf32>
    %40 = arith.cmpf oge, %38, %39 : vector<16x20xf32>
    %cst_26 = arith.constant 5.000000e-02 : f32
    %41 = vector.broadcast %cst_26 : f32 to vector<16x20xf32>
    %42 = arith.mulf %41, %38 : vector<16x20xf32>
    %43 = arith.select %40, %38, %42 : vector<16x20xi1>, vector<16x20xf32>
    %44 = vector.extract_strided_slice %43 {offsets = [0, 0], sizes = [16, 16], strides = [1, 1]} : vector<16x20xf32> to vector<16x16xf32>
    %45 = vector.extract_strided_slice %43 {offsets = [0, 1], sizes = [16, 16], strides = [1, 1]} : vector<16x20xf32> to vector<16x16xf32>
    %46 = vector.extract_strided_slice %43 {offsets = [0, 2], sizes = [16, 16], strides = [1, 1]} : vector<16x20xf32> to vector<16x16xf32>
    %47 = vector.extract_strided_slice %43 {offsets = [0, 3], sizes = [16, 16], strides = [1, 1]} : vector<16x20xf32> to vector<16x16xf32>
    %48 = vector.extract_strided_slice %43 {offsets = [0, 4], sizes = [16, 16], strides = [1, 1]} : vector<16x20xf32> to vector<16x16xf32>
    %49 = tpu.concatenate %44, %45, %46, %47, %48 in 0 : vector<16x16xf32>, vector<16x16xf32>, vector<16x16xf32>, vector<16x16xf32>, vector<16x16xf32> -> vector<80x16xf32>
    %c0_27 = arith.constant 0 : index
    %c0_28 = arith.constant 0 : index
    %50 = vector.load %arg10[%c0_27, %c0_28] : memref<32x80xf32, #tpu.memory_space<vmem>>, vector<32x80xf32>
    %cst_29 = arith.constant dense<0.000000e+00> : vector<32x16xf32>
    %51 = tpu.matmul %50, %49, %cst_29 {dimension_numbers = #tpu.dot_dimension_numbers<[1], [0], [0], [1], [0, 0, 1, 1], [], []>} : vector<32x80xf32>, vector<80x16xf32>, vector<32x16xf32> -> vector<32x16xf32>
    %c0_30 = arith.constant 0 : index
    %c0_31 = arith.constant 0 : index
    %52 = vector.load %arg11[%c0_30, %c0_31] : memref<32x1xf32, #tpu.memory_space<vmem>>, vector<32x1xf32>
    %53 = vector.broadcast %52 : vector<32x1xf32> to vector<32x16xf32>
    %54 = arith.addf %51, %53 : vector<32x16xf32>
    %c0_32 = arith.constant 0 : index
    %c0_33 = arith.constant 0 : index
    %55 = vector.load %arg12[%c0_32, %c0_33] : memref<16x12xf32, #tpu.memory_space<vmem>>, vector<16x12xf32>
    %cst_34 = arith.constant dense<0.000000e+00> : vector<32x12xf32>
    %56 = tpu.matmul %54, %55, %cst_34 {dimension_numbers = #tpu.dot_dimension_numbers<[1], [0], [0], [1], [0, 0, 1, 1], [], []>} : vector<32x16xf32>, vector<16x12xf32>, vector<32x12xf32> -> vector<32x12xf32>
    %c0_35 = arith.constant 0 : index
    %c0_36 = arith.constant 0 : index
    %57 = vector.load %arg13[%c0_35, %c0_36] : memref<16x12xf32, #tpu.memory_space<vmem>>, vector<16x12xf32>
    %cst_37 = arith.constant dense<0.000000e+00> : vector<32x12xf32>
    %58 = tpu.matmul %54, %57, %cst_37 {dimension_numbers = #tpu.dot_dimension_numbers<[1], [0], [0], [1], [0, 0, 1, 1], [], []>} : vector<32x16xf32>, vector<16x12xf32>, vector<32x12xf32> -> vector<32x12xf32>
    %59 = arith.maximumf %56, %58 : vector<32x12xf32>
    %cst_38 = arith.constant 0.000000e+00 : f32
    %60 = vector.broadcast %cst_38 : f32 to vector<32x12xf32>
    %61 = arith.cmpf oge, %59, %60 : vector<32x12xf32>
    %cst_39 = arith.constant 5.000000e-02 : f32
    %62 = vector.broadcast %cst_39 : f32 to vector<32x12xf32>
    %63 = arith.mulf %62, %59 : vector<32x12xf32>
    %64 = arith.select %61, %59, %63 : vector<32x12xi1>, vector<32x12xf32>
    %65 = vector.extract_strided_slice %64 {offsets = [0, 0], sizes = [32, 8], strides = [1, 1]} : vector<32x12xf32> to vector<32x8xf32>
    %66 = vector.extract_strided_slice %64 {offsets = [0, 1], sizes = [32, 8], strides = [1, 1]} : vector<32x12xf32> to vector<32x8xf32>
    %67 = vector.extract_strided_slice %64 {offsets = [0, 2], sizes = [32, 8], strides = [1, 1]} : vector<32x12xf32> to vector<32x8xf32>
    %68 = vector.extract_strided_slice %64 {offsets = [0, 3], sizes = [32, 8], strides = [1, 1]} : vector<32x12xf32> to vector<32x8xf32>
    %69 = vector.extract_strided_slice %64 {offsets = [0, 4], sizes = [32, 8], strides = [1, 1]} : vector<32x12xf32> to vector<32x8xf32>
    %70 = tpu.concatenate %65, %66, %67, %68, %69 in 0 : vector<32x8xf32>, vector<32x8xf32>, vector<32x8xf32>, vector<32x8xf32>, vector<32x8xf32> -> vector<160x8xf32>
    %c0_40 = arith.constant 0 : index
    %c0_41 = arith.constant 0 : index
    %71 = vector.load %arg14[%c0_40, %c0_41] : memref<64x160xf32, #tpu.memory_space<vmem>>, vector<64x160xf32>
    %cst_42 = arith.constant dense<0.000000e+00> : vector<64x8xf32>
    %72 = tpu.matmul %71, %70, %cst_42 {dimension_numbers = #tpu.dot_dimension_numbers<[1], [0], [0], [1], [0, 0, 1, 1], [], []>} : vector<64x160xf32>, vector<160x8xf32>, vector<64x8xf32> -> vector<64x8xf32>
    %c0_43 = arith.constant 0 : index
    %c0_44 = arith.constant 0 : index
    %73 = vector.load %arg15[%c0_43, %c0_44] : memref<64x1xf32, #tpu.memory_space<vmem>>, vector<64x1xf32>
    %74 = vector.broadcast %73 : vector<64x1xf32> to vector<64x8xf32>
    %75 = arith.addf %72, %74 : vector<64x8xf32>
    %c0_45 = arith.constant 0 : index
    %c0_46 = arith.constant 0 : index
    %76 = vector.load %arg16[%c0_45, %c0_46] : memref<8x4xf32, #tpu.memory_space<vmem>>, vector<8x4xf32>
    %cst_47 = arith.constant dense<0.000000e+00> : vector<64x4xf32>
    %77 = tpu.matmul %75, %76, %cst_47 {dimension_numbers = #tpu.dot_dimension_numbers<[1], [0], [0], [1], [0, 0, 1, 1], [], []>} : vector<64x8xf32>, vector<8x4xf32>, vector<64x4xf32> -> vector<64x4xf32>
    %c0_48 = arith.constant 0 : index
    %c0_49 = arith.constant 0 : index
    %78 = vector.load %arg17[%c0_48, %c0_49] : memref<8x4xf32, #tpu.memory_space<vmem>>, vector<8x4xf32>
    %cst_50 = arith.constant dense<0.000000e+00> : vector<64x4xf32>
    %79 = tpu.matmul %75, %78, %cst_50 {dimension_numbers = #tpu.dot_dimension_numbers<[1], [0], [0], [1], [0, 0, 1, 1], [], []>} : vector<64x8xf32>, vector<8x4xf32>, vector<64x4xf32> -> vector<64x4xf32>
    %80 = arith.maximumf %77, %79 : vector<64x4xf32>
    %cst_51 = arith.constant 0.000000e+00 : f32
    %81 = vector.broadcast %cst_51 : f32 to vector<64x4xf32>
    %82 = arith.cmpf oge, %80, %81 : vector<64x4xf32>
    %cst_52 = arith.constant 5.000000e-02 : f32
    %83 = vector.broadcast %cst_52 : f32 to vector<64x4xf32>
    %84 = arith.mulf %83, %80 : vector<64x4xf32>
    %85 = arith.select %82, %80, %84 : vector<64x4xi1>, vector<64x4xf32>
    %c0_53 = arith.constant 0 : index
    %c0_54 = arith.constant 0 : index
    %c0_55 = arith.constant 0 : index
    %86 = vector.load %arg18[%c0_53, %c0_54, %c0_55] : memref<1x64x4xf32, #tpu.memory_space<vmem>>, vector<1x64x4xf32>
    %87 = vector.shape_cast %86 : vector<1x64x4xf32> to vector<64x4xf32>
    %88 = vector.shape_cast %85 : vector<64x4xf32> to vector<1x64x4xf32>
    tpu.vector_store %arg18[%c0_53, %c0_54, %c0_55], %88 {strides = array<i32>} : memref<1x64x4xf32, #tpu.memory_space<vmem>>, vector<1x64x4xf32>,
    return
  }
  func.func @transform_0(%arg0: i32) -> (i32, i32, i32) {
    %c0_i32 = arith.constant 0 : i32
    %c0_i32_0 = arith.constant 0 : i32
    %c0_i32_1 = arith.constant 0 : i32
    return %arg0, %c0_i32, %c0_i32_0 : i32, i32, i32
  }
  func.func @transform_1(%arg0: i32) -> (i32, i32) {
    %c0_i32 = arith.constant 0 : i32
    %c0_i32_0 = arith.constant 0 : i32
    %c0_i32_1 = arith.constant 0 : i32
    return %c0_i32, %c0_i32_0 : i32, i32
  }
  func.func @transform_2(%arg0: i32) -> (i32, i32) {
    %c0_i32 = arith.constant 0 : i32
    %c0_i32_0 = arith.constant 0 : i32
    %c0_i32_1 = arith.constant 0 : i32
    return %c0_i32, %c0_i32_0 : i32, i32
  }
  func.func @transform_3(%arg0: i32) -> (i32, i32) {
    %c0_i32 = arith.constant 0 : i32
    %c0_i32_0 = arith.constant 0 : i32
    %c0_i32_1 = arith.constant 0 : i32
    return %c0_i32, %c0_i32_0 : i32, i32
  }
  func.func @transform_4(%arg0: i32) -> (i32, i32) {
    %c0_i32 = arith.constant 0 : i32
    %c0_i32_0 = arith.constant 0 : i32
    %c0_i32_1 = arith.constant 0 : i32
    return %c0_i32, %c0_i32_0 : i32, i32
  }
  func.func @transform_5(%arg0: i32) -> (i32, i32) {
    %c0_i32 = arith.constant 0 : i32
    %c0_i32_0 = arith.constant 0 : i32
    %c0_i32_1 = arith.constant 0 : i32
    return %c0_i32, %c0_i32_0 : i32, i32
  }
  func.func @transform_6(%arg0: i32) -> (i32, i32) {
    %c0_i32 = arith.constant 0 : i32
    %c0_i32_0 = arith.constant 0 : i32
    %c0_i32_1 = arith.constant 0 : i32
    return %c0_i32, %c0_i32_0 : i32, i32
  }
  func.func @transform_7(%arg0: i32) -> (i32, i32) {
    %c0_i32 = arith.constant 0 : i32
    %c0_i32_0 = arith.constant 0 : i32
    %c0_i32_1 = arith.constant 0 : i32
    return %c0_i32, %c0_i32_0 : i32, i32
  }
  func.func @transform_8(%arg0: i32) -> (i32, i32) {
    %c0_i32 = arith.constant 0 : i32
    %c0_i32_0 = arith.constant 0 : i32
    %c0_i32_1 = arith.constant 0 : i32
    return %c0_i32, %c0_i32_0 : i32, i32
  }
  func.func @transform_9(%arg0: i32) -> (i32, i32) {
    %c0_i32 = arith.constant 0 : i32
    %c0_i32_0 = arith.constant 0 : i32
    %c0_i32_1 = arith.constant 0 : i32
    return %c0_i32, %c0_i32_0 : i32, i32
  }
  func.func @transform_10(%arg0: i32) -> (i32, i32) {
    %c0_i32 = arith.constant 0 : i32
    %c0_i32_0 = arith.constant 0 : i32
    %c0_i32_1 = arith.constant 0 : i32
    return %c0_i32, %c0_i32_0 : i32, i32
  }
  func.func @transform_11(%arg0: i32) -> (i32, i32) {
    %c0_i32 = arith.constant 0 : i32
    %c0_i32_0 = arith.constant 0 : i32
    %c0_i32_1 = arith.constant 0 : i32
    return %c0_i32, %c0_i32_0 : i32, i32
  }
  func.func @transform_12(%arg0: i32) -> (i32, i32) {
    %c0_i32 = arith.constant 0 : i32
    %c0_i32_0 = arith.constant 0 : i32
    %c0_i32_1 = arith.constant 0 : i32
    return %c0_i32, %c0_i32_0 : i32, i32
  }
  func.func @transform_13(%arg0: i32) -> (i32, i32) {
    %c0_i32 = arith.constant 0 : i32
    %c0_i32_0 = arith.constant 0 : i32
    %c0_i32_1 = arith.constant 0 : i32
    return %c0_i32, %c0_i32_0 : i32, i32
  }
  func.func @transform_14(%arg0: i32) -> (i32, i32) {
    %c0_i32 = arith.constant 0 : i32
    %c0_i32_0 = arith.constant 0 : i32
    %c0_i32_1 = arith.constant 0 : i32
    return %c0_i32, %c0_i32_0 : i32, i32
  }
  func.func @transform_15(%arg0: i32) -> (i32, i32) {
    %c0_i32 = arith.constant 0 : i32
    %c0_i32_0 = arith.constant 0 : i32
    %c0_i32_1 = arith.constant 0 : i32
    return %c0_i32, %c0_i32_0 : i32, i32
  }
  func.func @transform_16(%arg0: i32) -> (i32, i32) {
    %c0_i32 = arith.constant 0 : i32
    %c0_i32_0 = arith.constant 0 : i32
    %c0_i32_1 = arith.constant 0 : i32
    return %c0_i32, %c0_i32_0 : i32, i32
  }
  func.func @transform_17(%arg0: i32) -> (i32, i32, i32) {
    %c0_i32 = arith.constant 0 : i32
    %c0_i32_0 = arith.constant 0 : i32
    %c0_i32_1 = arith.constant 0 : i32
    return %arg0, %c0_i32, %c0_i32_0 : i32, i32, i32
  }
}

</mosaic_0001>

<llo_original>
// kernel: tpu_custom_call.1
$region0: #{tpu_custom_call.1}
  #allocation0 [shape = 'u32[]', space=smem, size = 0x4, offset = 0x4, fixed_abs, tag = 'smem constant byte address 0x4 - core index']
  #allocation1 [shape = 'u32[144,128]{1,0:T(1,128)}', space=vmem, size = 0x12000, scoped, tag = 'internal scratch']
  %s0 = inlined_call_operand.vmem [shape: f32[2,1,100], index: 0, kind: input, shape index: {}]
  %s1 = inlined_call_operand.vmem [shape: f32[8,5], index: 1, kind: input, shape index: {}]
  %s2 = inlined_call_operand.vmem [shape: f32[8,1], index: 2, kind: input, shape index: {}]
  %s3 = inlined_call_operand.vmem [shape: f32[96,52], index: 3, kind: input, shape index: {}]
  %s4 = inlined_call_operand.vmem [shape: f32[96,52], index: 4, kind: input, shape index: {}]
  %s5 = inlined_call_operand.vmem [shape: f32[16,40], index: 5, kind: input, shape index: {}]
  %s6 = inlined_call_operand.vmem [shape: f32[16,1], index: 6, kind: input, shape index: {}]
  %s7 = inlined_call_operand.vmem [shape: f32[48,20], index: 7, kind: input, shape index: {}]
  %s8 = inlined_call_operand.vmem [shape: f32[48,20], index: 8, kind: input, shape index: {}]
  %s9 = inlined_call_operand.vmem [shape: f32[32,80], index: 9, kind: input, shape index: {}]
  %s10 = inlined_call_operand.vmem [shape: f32[32,1], index: 10, kind: input, shape index: {}]
  %s11 = inlined_call_operand.vmem [shape: f32[16,12], index: 11, kind: input, shape index: {}]
  %s12 = inlined_call_operand.vmem [shape: f32[16,12], index: 12, kind: input, shape index: {}]
  %s13 = inlined_call_operand.vmem [shape: f32[64,160], index: 13, kind: input, shape index: {}]
  %s14 = inlined_call_operand.vmem [shape: f32[64,1], index: 14, kind: input, shape index: {}]
  %s15 = inlined_call_operand.vmem [shape: f32[8,4], index: 15, kind: input, shape index: {}]
  %s16 = inlined_call_operand.vmem [shape: f32[8,4], index: 16, kind: input, shape index: {}]
  %s17 = inlined_call_operand.vmem [shape: f32[2,64,4], index: 17, kind: output, shape index: {}]
  %s18 = sld [smem:[#allocation0]]
  $region101: #{tpu_custom_call.1} parent=0
    _
  %s20 = ssub.s32 1, %s18
  %s21 = scalar_select 0, %s20, %s18
  loop: start=0, step=1, limit=4
  $region2: #{tpu_custom_call.1} parent=0 // loop_pre_header
    _
  $region3: #{tpu_custom_call.1} parent=0 // loop_header
    %s23 = sphi 0, %s27
    %p24 = scmp.ge.s32.totalorder %s23, 4
    %s33 = sphi 0, %s35
    %s36 = sphi 0, %s33
    %s37 = sphi 0, %s36
    %s53 = sphi 0, %s37
    %s57 = sphi 0, %s57
    %s59 = sphi 0, %s57
    %s60 = sphi 0, %s59
    %s74 = sphi 0, %s60
    %s78 = sphi 0, %s78
    %s80 = sphi 0, %s78
    %s81 = sphi 0, %s80
    %s95 = sphi 0, %s81
    %s99 = sphi 0, %s99
    %s101 = sphi 0, %s99
    %s102 = sphi 0, %s101
    %s116 = sphi 0, %s102
    %s120 = sphi 0, %s120
    %s122 = sphi 0, %s120
    %s123 = sphi 0, %s122
    %s137 = sphi 0, %s123
    %s141 = sphi 0, %s141
    %s143 = sphi 0, %s141
    %s144 = sphi 0, %s143
    %s158 = sphi 0, %s144
    %s162 = sphi 0, %s162
    %s164 = sphi 0, %s162
    %s165 = sphi 0, %s164
    %s179 = sphi 0, %s165
    %s183 = sphi 0, %s183
    %s185 = sphi 0, %s183
    %s186 = sphi 0, %s185
    %s200 = sphi 0, %s186
    %s204 = sphi 0, %s204
    %s206 = sphi 0, %s204
    %s207 = sphi 0, %s206
    %s221 = sphi 0, %s207
    %s225 = sphi 0, %s225
    %s227 = sphi 0, %s225
    %s228 = sphi 0, %s227
    %s242 = sphi 0, %s228
    %s246 = sphi 0, %s246
    %s248 = sphi 0, %s246
    %s249 = sphi 0, %s248
    %s263 = sphi 0, %s249
    %s267 = sphi 0, %s267
    %s269 = sphi 0, %s267
    %s270 = sphi 0, %s269
    %s284 = sphi 0, %s270
    %s288 = sphi 0, %s288
    %s290 = sphi 0, %s288
    %s291 = sphi 0, %s290
    %s305 = sphi 0, %s291
    %s309 = sphi 0, %s309
    %s311 = sphi 0, %s309
    %s312 = sphi 0, %s311
    %s326 = sphi 0, %s312
    %s330 = sphi 0, %s330
    %s332 = sphi 0, %s330
    %s333 = sphi 0, %s332
    %s347 = sphi 0, %s333
    %s351 = sphi 0, %s351
    %s353 = sphi 0, %s351
    %s354 = sphi 0, %s353
    %s368 = sphi 0, %s354
    %s372 = sphi 0, %s372
    %s374 = sphi 0, %s372
    %s375 = sphi 0, %s374
    %s389 = sphi 0, %s375
    %s395 = sphi 0, %s397
    %s398 = sphi 0, %s395
    %s399 = sphi 0, %s398
    %s415 = sphi 0, %s399
  $region4: #{tpu_custom_call.1} parent=0 // loop_header_branch
    %26 = sbr.rel (%p24) target = $region8
  $region5: #{tpu_custom_call.1} parent=0 // loop_body
    %s28 = ssub.s32 %s23, 1
    %s29 = ssub.s32 %s23, 2
    %s30 = sadd.s32 %s23, 1
    %s31 = ssub.s32 %s23, %s30
    %p32 = scmp.eq.s32.totalorder %s31, 0
    %s34 = sadd.s32 %s33, 1
    %s35 = scalar_select %p32, %s33, %s34
    %p38 = pneg %p32
    %p39 = scmp.eq.s32.totalorder %s23, 1
    %p40 = por %p38, %p39
    %p41 = scmp.ne.s32.totalorder %s33, %s36
    %p42 = scmp.eq.s32.totalorder %s23, 0
    %p43 = por %p41, %p42
    %p44 = scmp.ne.s32.totalorder %s33, %s36
    %p45 = scmp.eq.s32.totalorder %s28, 1
    %p46 = por %p44, %p45
    %p47 = scmp.ne.s32.totalorder %s36, %s37
    %p48 = scmp.eq.s32.totalorder %s28, 0
    %p49 = por %p47, %p48
    %p50 = scmp.ne.s32.totalorder %s36, %s37
    %p51 = scmp.eq.s32.totalorder %s29, 1
    %p52 = por %p50, %p51
    %p54 = scmp.ne.s32.totalorder %s37, %s53
    %p55 = scmp.eq.s32.totalorder %s29, 0
    %p56 = por %p54, %p55
    %s58 = sadd.s32 %s57, 1
    %p61 = scmp.eq.s32.totalorder %s23, 1
    %p62 = scmp.ne.s32.totalorder %s57, %s59
    %p63 = scmp.eq.s32.totalorder %s23, 0
    %p64 = por %p62, %p63
    %p65 = scmp.ne.s32.totalorder %s57, %s59
    %p66 = scmp.eq.s32.totalorder %s28, 1
    %p67 = por %p65, %p66
    %p68 = scmp.ne.s32.totalorder %s59, %s60
    %p69 = scmp.eq.s32.totalorder %s28, 0
    %p70 = por %p68, %p69
    %p71 = scmp.ne.s32.totalorder %s59, %s60
    %p72 = scmp.eq.s32.totalorder %s29, 1
    %p73 = por %p71, %p72
    %p75 = scmp.ne.s32.totalorder %s60, %s74
    %p76 = scmp.eq.s32.totalorder %s29, 0
    %p77 = por %p75, %p76
    %s79 = sadd.s32 %s78, 1
    %p82 = scmp.eq.s32.totalorder %s23, 1
    %p83 = scmp.ne.s32.totalorder %s78, %s80
    %p84 = scmp.eq.s32.totalorder %s23, 0
    %p85 = por %p83, %p84
    %p86 = scmp.ne.s32.totalorder %s78, %s80
    %p87 = scmp.eq.s32.totalorder %s28, 1
    %p88 = por %p86, %p87
    %p89 = scmp.ne.s32.totalorder %s80, %s81
    %p90 = scmp.eq.s32.totalorder %s28, 0
    %p91 = por %p89, %p90
    %p92 = scmp.ne.s32.totalorder %s80, %s81
    %p93 = scmp.eq.s32.totalorder %s29, 1
    %p94 = por %p92, %p93
    %p96 = scmp.ne.s32.totalorder %s81, %s95
    %p97 = scmp.eq.s32.totalorder %s29, 0
    %p98 = por %p96, %p97
    %s100 = sadd.s32 %s99, 1
    %p103 = scmp.eq.s32.totalorder %s23, 1
    %p104 = scmp.ne.s32.totalorder %s99, %s101
    %p105 = scmp.eq.s32.totalorder %s23, 0
    %p106 = por %p104, %p105
    %p107 = scmp.ne.s32.totalorder %s99, %s101
    %p108 = scmp.eq.s32.totalorder %s28, 1
    %p109 = por %p107, %p108
    %p110 = scmp.ne.s32.totalorder %s101, %s102
    %p111 = scmp.eq.s32.totalorder %s28, 0
    %p112 = por %p110, %p111
    %p113 = scmp.ne.s32.totalorder %s101, %s102
    %p114 = scmp.eq.s32.totalorder %s29, 1
    %p115 = por %p113, %p114
    %p117 = scmp.ne.s32.totalorder %s102, %s116
    %p118 = scmp.eq.s32.totalorder %s29, 0
    %p119 = por %p117, %p118
    %s121 = sadd.s32 %s120, 1
    %p124 = scmp.eq.s32.totalorder %s23, 1
    %p125 = scmp.ne.s32.totalorder %s120, %s122
    %p126 = scmp.eq.s32.totalorder %s23, 0
    %p127 = por %p125, %p126
    %p128 = scmp.ne.s32.totalorder %s120, %s122
    %p129 = scmp.eq.s32.totalorder %s28, 1
    %p130 = por %p128, %p129
    %p131 = scmp.ne.s32.totalorder %s122, %s123
    %p132 = scmp.eq.s32.totalorder %s28, 0
    %p133 = por %p131, %p132
    %p134 = scmp.ne.s32.totalorder %s122, %s123
    %p135 = scmp.eq.s32.totalorder %s29, 1
    %p136 = por %p134, %p135
    %p138 = scmp.ne.s32.totalorder %s123, %s137
    %p139 = scmp.eq.s32.totalorder %s29, 0
    %p140 = por %p138, %p139
    %s142 = sadd.s32 %s141, 1
    %p145 = scmp.eq.s32.totalorder %s23, 1
    %p146 = scmp.ne.s32.totalorder %s141, %s143
    %p147 = scmp.eq.s32.totalorder %s23, 0
    %p148 = por %p146, %p147
    %p149 = scmp.ne.s32.totalorder %s141, %s143
    %p150 = scmp.eq.s32.totalorder %s28, 1
    %p151 = por %p149, %p150
    %p152 = scmp.ne.s32.totalorder %s143, %s144
    %p153 = scmp.eq.s32.totalorder %s28, 0
    %p154 = por %p152, %p153
    %p155 = scmp.ne.s32.totalorder %s143, %s144
    %p156 = scmp.eq.s32.totalorder %s29, 1
    %p157 = por %p155, %p156
    %p159 = scmp.ne.s32.totalorder %s144, %s158
    %p160 = scmp.eq.s32.totalorder %s29, 0
    %p161 = por %p159, %p160
    %s163 = sadd.s32 %s162, 1
    %p166 = scmp.eq.s32.totalorder %s23, 1
    %p167 = scmp.ne.s32.totalorder %s162, %s164
    %p168 = scmp.eq.s32.totalorder %s23, 0
    %p169 = por %p167, %p168
    %p170 = scmp.ne.s32.totalorder %s162, %s164
    %p171 = scmp.eq.s32.totalorder %s28, 1
    %p172 = por %p170, %p171
    %p173 = scmp.ne.s32.totalorder %s164, %s165
    %p174 = scmp.eq.s32.totalorder %s28, 0
    %p175 = por %p173, %p174
    %p176 = scmp.ne.s32.totalorder %s164, %s165
    %p177 = scmp.eq.s32.totalorder %s29, 1
    %p178 = por %p176, %p177
    %p180 = scmp.ne.s32.totalorder %s165, %s179
    %p181 = scmp.eq.s32.totalorder %s29, 0
    %p182 = por %p180, %p181
    %s184 = sadd.s32 %s183, 1
    %p187 = scmp.eq.s32.totalorder %s23, 1
    %p188 = scmp.ne.s32.totalorder %s183, %s185
    %p189 = scmp.eq.s32.totalorder %s23, 0
    %p190 = por %p188, %p189
    %p191 = scmp.ne.s32.totalorder %s183, %s185
    %p192 = scmp.eq.s32.totalorder %s28, 1
    %p193 = por %p191, %p192
    %p194 = scmp.ne.s32.totalorder %s185, %s186
    %p195 = scmp.eq.s32.totalorder %s28, 0
    %p196 = por %p194, %p195
    %p197 = scmp.ne.s32.totalorder %s185, %s186
    %p198 = scmp.eq.s32.totalorder %s29, 1
    %p199 = por %p197, %p198
    %p201 = scmp.ne.s32.totalorder %s186, %s200
    %p202 = scmp.eq.s32.totalorder %s29, 0
    %p203 = por %p201, %p202
    %s205 = sadd.s32 %s204, 1
    %p208 = scmp.eq.s32.totalorder %s23, 1
    %p209 = scmp.ne.s32.totalorder %s204, %s206
    %p210 = scmp.eq.s32.totalorder %s23, 0
    %p211 = por %p209, %p210
    %p212 = scmp.ne.s32.totalorder %s204, %s206
    %p213 = scmp.eq.s32.totalorder %s28, 1
    %p214 = por %p212, %p213
    %p215 = scmp.ne.s32.totalorder %s206, %s207
    %p216 = scmp.eq.s32.totalorder %s28, 0
    %p217 = por %p215, %p216
    %p218 = scmp.ne.s32.totalorder %s206, %s207
    %p219 = scmp.eq.s32.totalorder %s29, 1
    %p220 = por %p218, %p219
    %p222 = scmp.ne.s32.totalorder %s207, %s221
    %p223 = scmp.eq.s32.totalorder %s29, 0
    %p224 = por %p222, %p223
    %s226 = sadd.s32 %s225, 1
    %p229 = scmp.eq.s32.totalorder %s23, 1
    %p230 = scmp.ne.s32.totalorder %s225, %s227
    %p231 = scmp.eq.s32.totalorder %s23, 0
    %p232 = por %p230, %p231
    %p233 = scmp.ne.s32.totalorder %s225, %s227
    %p234 = scmp.eq.s32.totalorder %s28, 1
    %p235 = por %p233, %p234
    %p236 = scmp.ne.s32.totalorder %s227, %s228
    %p237 = scmp.eq.s32.totalorder %s28, 0
    %p238 = por %p236, %p237
    %p239 = scmp.ne.s32.totalorder %s227, %s228
    %p240 = scmp.eq.s32.totalorder %s29, 1
    %p241 = por %p239, %p240
    %p243 = scmp.ne.s32.totalorder %s228, %s242
    %p244 = scmp.eq.s32.totalorder %s29, 0
    %p245 = por %p243, %p244
    %s247 = sadd.s32 %s246, 1
    %p250 = scmp.eq.s32.totalorder %s23, 1
    %p251 = scmp.ne.s32.totalorder %s246, %s248
    %p252 = scmp.eq.s32.totalorder %s23, 0
    %p253 = por %p251, %p252
    %p254 = scmp.ne.s32.totalorder %s246, %s248
    %p255 = scmp.eq.s32.totalorder %s28, 1
    %p256 = por %p254, %p255
    %p257 = scmp.ne.s32.totalorder %s248, %s249
    %p258 = scmp.eq.s32.totalorder %s28, 0
    %p259 = por %p257, %p258
    %p260 = scmp.ne.s32.totalorder %s248, %s249
    %p261 = scmp.eq.s32.totalorder %s29, 1
    %p262 = por %p260, %p261
    %p264 = scmp.ne.s32.totalorder %s249, %s263
    %p265 = scmp.eq.s32.totalorder %s29, 0
    %p266 = por %p264, %p265
    %s268 = sadd.s32 %s267, 1
    %p271 = scmp.eq.s32.totalorder %s23, 1
    %p272 = scmp.ne.s32.totalorder %s267, %s269
    %p273 = scmp.eq.s32.totalorder %s23, 0
    %p274 = por %p272, %p273
    %p275 = scmp.ne.s32.totalorder %s267, %s269
    %p276 = scmp.eq.s32.totalorder %s28, 1
    %p277 = por %p275, %p276
    %p278 = scmp.ne.s32.totalorder %s269, %s270
    %p279 = scmp.eq.s32.totalorder %s28, 0
    %p280 = por %p278, %p279
    %p281 = scmp.ne.s32.totalorder %s269, %s270
    %p282 = scmp.eq.s32.totalorder %s29, 1
    %p283 = por %p281, %p282
    %p285 = scmp.ne.s32.totalorder %s270, %s284
    %p286 = scmp.eq.s32.totalorder %s29, 0
    %p287 = por %p285, %p286
    %s289 = sadd.s32 %s288, 1
    %p292 = scmp.eq.s32.totalorder %s23, 1
    %p293 = scmp.ne.s32.totalorder %s288, %s290
    %p294 = scmp.eq.s32.totalorder %s23, 0
    %p295 = por %p293, %p294
    %p296 = scmp.ne.s32.totalorder %s288, %s290
    %p297 = scmp.eq.s32.totalorder %s28, 1
    %p298 = por %p296, %p297
    %p299 = scmp.ne.s32.totalorder %s290, %s291
    %p300 = scmp.eq.s32.totalorder %s28, 0
    %p301 = por %p299, %p300
    %p302 = scmp.ne.s32.totalorder %s290, %s291
    %p303 = scmp.eq.s32.totalorder %s29, 1
    %p304 = por %p302, %p303
    %p306 = scmp.ne.s32.totalorder %s291, %s305
    %p307 = scmp.eq.s32.totalorder %s29, 0
    %p308 = por %p306, %p307
    %s310 = sadd.s32 %s309, 1
    %p313 = scmp.eq.s32.totalorder %s23, 1
    %p314 = scmp.ne.s32.totalorder %s309, %s311
    %p315 = scmp.eq.s32.totalorder %s23, 0
    %p316 = por %p314, %p315
    %p317 = scmp.ne.s32.totalorder %s309, %s311
    %p318 = scmp.eq.s32.totalorder %s28, 1
    %p319 = por %p317, %p318
    %p320 = scmp.ne.s32.totalorder %s311, %s312
    %p321 = scmp.eq.s32.totalorder %s28, 0
    %p322 = por %p320, %p321
    %p323 = scmp.ne.s32.totalorder %s311, %s312
    %p324 = scmp.eq.s32.totalorder %s29, 1
    %p325 = por %p323, %p324
    %p327 = scmp.ne.s32.totalorder %s312, %s326
    %p328 = scmp.eq.s32.totalorder %s29, 0
    %p329 = por %p327, %p328
    %s331 = sadd.s32 %s330, 1
    %p334 = scmp.eq.s32.totalorder %s23, 1
    %p335 = scmp.ne.s32.totalorder %s330, %s332
    %p336 = scmp.eq.s32.totalorder %s23, 0
    %p337 = por %p335, %p336
    %p338 = scmp.ne.s32.totalorder %s330, %s332
    %p339 = scmp.eq.s32.totalorder %s28, 1
    %p340 = por %p338, %p339
    %p341 = scmp.ne.s32.totalorder %s332, %s333
    %p342 = scmp.eq.s32.totalorder %s28, 0
    %p343 = por %p341, %p342
    %p344 = scmp.ne.s32.totalorder %s332, %s333
    %p345 = scmp.eq.s32.totalorder %s29, 1
    %p346 = por %p344, %p345
    %p348 = scmp.ne.s32.totalorder %s333, %s347
    %p349 = scmp.eq.s32.totalorder %s29, 0
    %p350 = por %p348, %p349
    %s352 = sadd.s32 %s351, 1
    %p355 = scmp.eq.s32.totalorder %s23, 1
    %p356 = scmp.ne.s32.totalorder %s351, %s353
    %p357 = scmp.eq.s32.totalorder %s23, 0
    %p358 = por %p356, %p357
    %p359 = scmp.ne.s32.totalorder %s351, %s353
    %p360 = scmp.eq.s32.totalorder %s28, 1
    %p361 = por %p359, %p360
    %p362 = scmp.ne.s32.totalorder %s353, %s354
    %p363 = scmp.eq.s32.totalorder %s28, 0
    %p364 = por %p362, %p363
    %p365 = scmp.ne.s32.totalorder %s353, %s354
    %p366 = scmp.eq.s32.totalorder %s29, 1
    %p367 = por %p365, %p366
    %p369 = scmp.ne.s32.totalorder %s354, %s368
    %p370 = scmp.eq.s32.totalorder %s29, 0
    %p371 = por %p369, %p370
    %s373 = sadd.s32 %s372, 1
    %p376 = scmp.eq.s32.totalorder %s23, 1
    %p377 = scmp.ne.s32.totalorder %s372, %s374
    %p378 = scmp.eq.s32.totalorder %s23, 0
    %p379 = por %p377, %p378
    %p380 = scmp.ne.s32.totalorder %s372, %s374
    %p381 = scmp.eq.s32.totalorder %s28, 1
    %p382 = por %p380, %p381
    %p383 = scmp.ne.s32.totalorder %s374, %s375
    %p384 = scmp.eq.s32.totalorder %s28, 0
    %p385 = por %p383, %p384
    %p386 = scmp.ne.s32.totalorder %s374, %s375
    %p387 = scmp.eq.s32.totalorder %s29, 1
    %p388 = por %p386, %p387
    %p390 = scmp.ne.s32.totalorder %s375, %s389
    %p391 = scmp.eq.s32.totalorder %s29, 0
    %p392 = por %p390, %p391
    %s393 = ssub.s32 %s23, %s30
    %p394 = scmp.eq.s32.totalorder %s393, 0
    %s396 = sadd.s32 %s395, 1
    %s397 = scalar_select %p394, %s395, %s396
    %p400 = pneg %p394
    %p401 = scmp.eq.s32.totalorder %s23, 1
    %p402 = por %p400, %p401
    %p403 = scmp.ne.s32.totalorder %s395, %s398
    %p404 = scmp.eq.s32.totalorder %s23, 0
    %p405 = por %p403, %p404
    %p406 = scmp.ne.s32.totalorder %s395, %s398
    %p407 = scmp.eq.s32.totalorder %s28, 1
    %p408 = por %p406, %p407
    %p409 = scmp.ne.s32.totalorder %s398, %s399
    %p410 = scmp.eq.s32.totalorder %s28, 0
    %p411 = por %p409, %p410
    %p412 = scmp.ne.s32.totalorder %s398, %s399
    %p413 = scmp.eq.s32.totalorder %s29, 1
    %p414 = por %p412, %p413
    %p416 = scmp.ne.s32.totalorder %s399, %s415
    %p417 = scmp.eq.s32.totalorder %s29, 0
    %p418 = por %p416, %p417
    %p419 = scmp.le.s32.totalorder 1, %s23
    %p420 = scmp.lt.s32.totalorder %s23, 3
    %p421 = pnand %p419, %p420
    %p422 = pneg %p421
    // Predicated region
    $region9: #{tpu_custom_call.1} parent=5 // pred_check
      _
    $region10: #{tpu_custom_call.1} parent=5 // pred_check_branch
      %424 = sbr.rel (%p421) target = $region12
    $region11: #{tpu_custom_call.1} parent=5 // pred_region
      %s425 = ssub.s32 %s23, 1
      // Predicated region
      $region13: #{tpu_custom_call.1} parent=11 // pred_check
        %p426 = pneg %p70
      $region14: #{tpu_custom_call.1} parent=11 // pred_check_branch
        %428 = sbr.rel (%p426) target = $region16
      $region15: #{tpu_custom_call.1} parent=11 // pred_region
        _
      $region16: #{tpu_custom_call.1} parent=11 // pred_fallthru
        _
      // Predicated region
      $region17: #{tpu_custom_call.1} parent=11 // pred_check
        %p429 = pneg %p91
      $region18: #{tpu_custom_call.1} parent=11 // pred_check_branch
        %431 = sbr.rel (%p429) target = $region20
      $region19: #{tpu_custom_call.1} parent=11 // pred_region
        _
      $region20: #{tpu_custom_call.1} parent=11 // pred_fallthru
        _
      // Predicated region
      $region21: #{tpu_custom_call.1} parent=11 // pred_check
        %p432 = pneg %p112
      $region22: #{tpu_custom_call.1} parent=11 // pred_check_branch
        %434 = sbr.rel (%p432) target = $region24
      $region23: #{tpu_custom_call.1} parent=11 // pred_region
        _
      $region24: #{tpu_custom_call.1} parent=11 // pred_fallthru
        _
      // Predicated region
      $region25: #{tpu_custom_call.1} parent=11 // pred_check
        %p435 = pneg %p133
      $region26: #{tpu_custom_call.1} parent=11 // pred_check_branch
        %437 = sbr.rel (%p435) target = $region28
      $region27: #{tpu_custom_call.1} parent=11 // pred_region
        _
      $region28: #{tpu_custom_call.1} parent=11 // pred_fallthru
        _
      // Predicated region
      $region29: #{tpu_custom_call.1} parent=11 // pred_check
        %p438 = pneg %p154
      $region30: #{tpu_custom_call.1} parent=11 // pred_check_branch
        %440 = sbr.rel (%p438) target = $region32
      $region31: #{tpu_custom_call.1} parent=11 // pred_region
        _
      $region32: #{tpu_custom_call.1} parent=11 // pred_fallthru
        _
      // Predicated region
      $region33: #{tpu_custom_call.1} parent=11 // pred_check
        %p441 = pneg %p175
      $region34: #{tpu_custom_call.1} parent=11 // pred_check_branch
        %443 = sbr.rel (%p441) target = $region36
      $region35: #{tpu_custom_call.1} parent=11 // pred_region
        _
      $region36: #{tpu_custom_call.1} parent=11 // pred_fallthru
        _
      // Predicated region
      $region37: #{tpu_custom_call.1} parent=11 // pred_check
        %p444 = pneg %p196
      $region38: #{tpu_custom_call.1} parent=11 // pred_check_branch
        %446 = sbr.rel (%p444) target = $region40
      $region39: #{tpu_custom_call.1} parent=11 // pred_region
        _
      $region40: #{tpu_custom_call.1} parent=11 // pred_fallthru
        _
      // Predicated region
      $region41: #{tpu_custom_call.1} parent=11 // pred_check
        %p447 = pneg %p217
      $region42: #{tpu_custom_call.1} parent=11 // pred_check_branch
        %449 = sbr.rel (%p447) target = $region44
      $region43: #{tpu_custom_call.1} parent=11 // pred_region
        _
      $region44: #{tpu_custom_call.1} parent=11 // pred_fallthru
        _
      // Predicated region
      $region45: #{tpu_custom_call.1} parent=11 // pred_check
        %p450 = pneg %p238
      $region46: #{tpu_custom_call.1} parent=11 // pred_check_branch
        %452 = sbr.rel (%p450) target = $region48
      $region47: #{tpu_custom_call.1} parent=11 // pred_region
        _
      $region48: #{tpu_custom_call.1} parent=11 // pred_fallthru
        _
      // Predicated region
      $region49: #{tpu_custom_call.1} parent=11 // pred_check
        %p453 = pneg %p259
      $region50: #{tpu_custom_call.1} parent=11 // pred_check_branch
        %455 = sbr.rel (%p453) target = $region52
      $region51: #{tpu_custom_call.1} parent=11 // pred_region
        _
      $region52: #{tpu_custom_call.1} parent=11 // pred_fallthru
        _
      // Predicated region
      $region53: #{tpu_custom_call.1} parent=11 // pred_check
        %p456 = pneg %p280
      $region54: #{tpu_custom_call.1} parent=11 // pred_check_branch
        %458 = sbr.rel (%p456) target = $region56
      $region55: #{tpu_custom_call.1} parent=11 // pred_region
        _
      $region56: #{tpu_custom_call.1} parent=11 // pred_fallthru
        _
      // Predicated region
      $region57: #{tpu_custom_call.1} parent=11 // pred_check
        %p459 = pneg %p301
      $region58: #{tpu_custom_call.1} parent=11 // pred_check_branch
        %461 = sbr.rel (%p459) target = $region60
      $region59: #{tpu_custom_call.1} parent=11 // pred_region
        _
      $region60: #{tpu_custom_call.1} parent=11 // pred_fallthru
        _
      // Predicated region
      $region61: #{tpu_custom_call.1} parent=11 // pred_check
        %p462 = pneg %p322
      $region62: #{tpu_custom_call.1} parent=11 // pred_check_branch
        %464 = sbr.rel (%p462) target = $region64
      $region63: #{tpu_custom_call.1} parent=11 // pred_region
        _
      $region64: #{tpu_custom_call.1} parent=11 // pred_fallthru
        _
      // Predicated region
      $region65: #{tpu_custom_call.1} parent=11 // pred_check
        %p465 = pneg %p343
      $region66: #{tpu_custom_call.1} parent=11 // pred_check_branch
        %467 = sbr.rel (%p465) target = $region68
      $region67: #{tpu_custom_call.1} parent=11 // pred_region
        _
      $region68: #{tpu_custom_call.1} parent=11 // pred_fallthru
        _
      // Predicated region
      $region69: #{tpu_custom_call.1} parent=11 // pred_check
        %p468 = pneg %p364
      $region70: #{tpu_custom_call.1} parent=11 // pred_check_branch
        %470 = sbr.rel (%p468) target = $region72
      $region71: #{tpu_custom_call.1} parent=11 // pred_region
        _
      $region72: #{tpu_custom_call.1} parent=11 // pred_fallthru
        _
      // Predicated region
      $region73: #{tpu_custom_call.1} parent=11 // pred_check
        %p471 = pneg %p385
      $region74: #{tpu_custom_call.1} parent=11 // pred_check_branch
        %473 = sbr.rel (%p471) target = $region76
      $region75: #{tpu_custom_call.1} parent=11 // pred_region
        _
      $region76: #{tpu_custom_call.1} parent=11 // pred_fallthru
        _
    $region12: #{tpu_custom_call.1} parent=5 // pred_fallthru
      _
    %p474 = scmp.lt.s32.totalorder %s23, 2
    // Predicated region
    $region77: #{tpu_custom_call.1} parent=5 // pred_check
      %p475 = pneg %p474
    $region78: #{tpu_custom_call.1} parent=5 // pred_check_branch
      %477 = sbr.rel (%p475) target = $region80
    $region79: #{tpu_custom_call.1} parent=5 // pred_region
      // Predicated region
      $region81: #{tpu_custom_call.1} parent=79 // pred_check
        %p478 = pneg %p43
      $region82: #{tpu_custom_call.1} parent=79 // pred_check_branch
        %480 = sbr.rel (%p478) target = $region84
      $region83: #{tpu_custom_call.1} parent=79 // pred_region
        %p481 = scmp.lt.s32.totalorder %s23, 1
        %s482 = scalar_select %p481, %s23, 1
        %s483 = scalar_lea.vmem %s0, %s482
      $region84: #{tpu_custom_call.1} parent=79 // pred_fallthru
        _
    $region80: #{tpu_custom_call.1} parent=5 // pred_fallthru
      _
    %p484 = scmp.le.s32.totalorder 1, %s23
    %p485 = scmp.lt.s32.totalorder %s23, 3
    %p486 = pnand %p484, %p485
    %p487 = pneg %p486
    // Predicated region
    $region85: #{tpu_custom_call.1} parent=5 // pred_check
      _
    $region86: #{tpu_custom_call.1} parent=5 // pred_check_branch
      %489 = sbr.rel (%p486) target = $region88
    $region87: #{tpu_custom_call.1} parent=5 // pred_region
      %s490 = ssub.s32 %s23, 1
      %p491 = scmp.lt.s32.totalorder %s28, 1
      %s492 = scalar_select %p491, %s28, 1
      %s493 = scalar_lea.vmem %s0, %s492
      %p494 = pneg %p49
      %p495 = pneg %p46
      %p496 = pneg %p70
      %p497 = pneg %p67
      %p498 = pneg %p91
      %p499 = pneg %p88
      %p500 = pneg %p112
      %p501 = pneg %p109
      %p502 = pneg %p133
      %p503 = pneg %p130
      %p504 = pneg %p154
      %p505 = pneg %p151
      %p506 = pneg %p175
      %p507 = pneg %p172
      %p508 = pneg %p196
      %p509 = pneg %p193
      %p510 = pneg %p217
      %p511 = pneg %p214
      %p512 = pneg %p238
      %p513 = pneg %p235
      %p514 = pneg %p259
      %p515 = pneg %p256
      %p516 = pneg %p280
      %p517 = pneg %p277
      %p518 = pneg %p301
      %p519 = pneg %p298
      %p520 = pneg %p322
      %p521 = pneg %p319
      %p522 = pneg %p343
      %p523 = pneg %p340
      %p524 = pneg %p364
      %p525 = pneg %p361
      %p526 = pneg %p385
      %p527 = pneg %p382
      %p528 = pneg %p411
      %p529 = pneg %p408
      %p530 = scmp.lt.s32.totalorder %s28, 1
      %s531 = scalar_select %p530, %s28, 1
      %s532 = smul.addr %s531, 8
      %s533 = smul.addr %s532, 8
      %s534 = scalar_lea.vmem %s17, %s533
      %p535 = scmp.lt.s32.totalorder %s28, 1
      %s536 = scalar_select %p535, %s28, 1
      %s537 = scalar_lea.vmem %s0, %s536
      %p538 = scmp.lt.s32.totalorder %s28, 1
      %s539 = scalar_select %p538, %s28, 1
      %s540 = smul.addr %s539, 8
      %s541 = smul.addr %s540, 8
      %s542 = scalar_lea.vmem %s17, %s541
      %v543 = vld [vmem:[%s537] sm:$0x1]
      %v545 = vlaneseq
      %v546 = vshrl.u32 %v545, 7
      %v547 = vsub.s32 0, %v546
      %v548 = vrot.slane %v543, %v547
      %549 = vrot.lane.b32.xlu0 %v548, 127
      %v550 = vpop.permute.xlu0 %549
      %552 = vrot.lane.b32.xlu0 %v548, 126
      %v553 = vpop.permute.xlu0 %552
      %555 = vrot.lane.b32.xlu0 %v548, 125
      %v556 = vpop.permute.xlu0 %555
      %558 = vrot.lane.b32.xlu0 %v548, 124
      %v559 = vpop.permute.xlu0 %558
      %vm561 = vcmask 1040384
      %v562 = vsel %vm561, %v543, %v550
      %vm563 = vcmask 1041408
      %v564 = vsel %vm563, %v562, %v553
      %vm565 = vcmask 1042432
      %v566 = vsel %vm565, %v564, %v556
      %vm567 = vcmask 1043456
      %v568 = vsel %vm567, %v566, %v559
      %v569 = vld [vmem:[%s1] sm:$0xff]
      %v570 = vld [vmem:[%s2] sm:$0xff]
      %572 = vset.pattern.permute.xlu0 0
      %573 = vperm.xlu0 %572, %v570
      %v574 = vpop.permute.xlu0 %573
      %vm576 = vcmask 39936
      %v578 = vsel %vm576, %v569, 0
      %vm580 = vcmask 1044480
      %v582 = vsel %vm580, %v568, 0
      %584 = vmatprep.subr.mxu0 0.0
      %585 = vmatpush1.msra.mxu0 %v582
      %586 = vmatprep.subr.mxu0 0.0
      %587 = vmatpush1.msra.mxu0 0.0
      %588 = vmatprep.subr.mxu0 0.0
      %589 = vmatpush1.msra.mxu0 0.0
      %590 = vmatprep.subr.mxu0 0.0
      %591 = vmatpush1.msra.mxu0 0.0
      %592 = vmatprep.subr.mxu0 0.0
      %593 = vmatpush1.msra.mxu0 0.0
      %594 = vmatprep.subr.mxu0 0.0
      %595 = vmatpush1.msra.mxu0 0.0
      %596 = vmatprep.subr.mxu0 0.0
      %597 = vmatpush1.msra.mxu0 0.0
      %598 = vmatprep.subr.mxu0 0.0
      %599 = vmatpush1.msra.mxu0 0.0
      %600 = vmatprep.subr.mxu0 0.0
      %601 = vmatpush1.msra.mxu0 0.0
      %602 = vmatprep.subr.mxu0 0.0
      %603 = vmatpush1.msra.mxu0 0.0
      %604 = vmatprep.subr.mxu0 0.0
      %605 = vmatpush1.msra.mxu0 0.0
      %606 = vmatprep.subr.mxu0 0.0
      %607 = vmatpush1.msra.mxu0 0.0
      %608 = vmatprep.subr.mxu0 0.0
      %609 = vmatpush1.msra.mxu0 0.0
      %610 = vmatprep.subr.mxu0 0.0
      %611 = vmatpush1.msra.mxu0 0.0
      %612 = vmatprep.subr.mxu0 0.0
      %613 = vmatpush1.msra.mxu0 0.0
      %614 = vmatprep.subr.mxu0 0.0
      %615 = vmatpush1.msra.mxu0 0.0
      %616 = vmatprep.subr.mxu0 0.0
      %617 = vmatpush1.msra.mxu0 0.0
      %618 = vmatprep.subr.mxu0 0.0
      %619 = vmatpush1.msra.mxu0 0.0
      %620 = vmatprep.subr.mxu0 0.0
      %621 = vmatpush1.msra.mxu0 0.0
      %622 = vmatprep.subr.mxu0 0.0
      %623 = vmatpush1.msra.mxu0 0.0
      %624 = vmatprep.subr.mxu0 0.0
      %625 = vmatpush1.msra.mxu0 0.0
      %626 = vmatprep.subr.mxu0 0.0
      %627 = vmatpush1.msra.mxu0 0.0
      %628 = vmatprep.subr.mxu0 0.0
      %629 = vmatpush1.msra.mxu0 0.0
      %630 = vmatprep.subr.mxu0 0.0
      %631 = vmatpush1.msra.mxu0 0.0
      %632 = vmatprep.subr.mxu0 0.0
      %633 = vmatpush1.msra.mxu0 0.0
      %634 = vmatprep.subr.mxu0 0.0
      %635 = vmatpush1.msra.mxu0 0.0
      %636 = vmatprep.subr.mxu0 0.0
      %637 = vmatpush1.msra.mxu0 0.0
      %638 = vmatprep.subr.mxu0 0.0
      %639 = vmatpush1.msra.mxu0 0.0
      %640 = vmatprep.subr.mxu0 0.0
      %641 = vmatpush1.msra.mxu0 0.0
      %642 = vmatprep.subr.mxu0 0.0
      %643 = vmatpush1.msra.mxu0 0.0
      %644 = vmatprep.subr.mxu0 0.0
      %645 = vmatpush1.msra.mxu0 0.0
      %646 = vmatprep.subr.mxu0 0.0
      %647 = vmatpush1.msra.mxu0 0.0
      %648 = vmatprep.mubr.f32.mxu0 0.0
      %649 = vmatmul.mubr.f32.gmra.mrb[0].mxu0 %v578
      %v650 = vpop.f32.mrb[0].mxu0
      %v651 = vadd.f32 %v574, %v650
      %v652 = vpop.f32.mrb[0].mxu0
      %653 = vdwg.mxu0
      %v654 = vld [vmem:[%s3] sm:$0xff]
      %v655 = vld [vmem:[%s3 + $0x8] sm:$0xff]
      %v656 = vld [vmem:[%s3 + $0x10] sm:$0xff]
      %v657 = vld [vmem:[%s3 + $0x18] sm:$0xff]
      %v658 = vld [vmem:[%s3 + $0x20] sm:$0xff]
      %v659 = vld [vmem:[%s3 + $0x28] sm:$0xff]
      %v660 = vld [vmem:[%s3 + $0x30] sm:$0xff]
      %v661 = vld [vmem:[%s3 + $0x38] sm:$0xff]
      %v662 = vld [vmem:[%s3 + $0x40] sm:$0xff]
      %v663 = vld [vmem:[%s3 + $0x48] sm:$0xff]
      %v664 = vld [vmem:[%s3 + $0x50] sm:$0xff]
      %v665 = vld [vmem:[%s3 + $0x58] sm:$0xff]
      %vm666 = vcmask 785408
      %v668 = vsel %vm666, %v651, 0
      %670 = vmatprep.subr.mxu0 0.0
      %671 = vmatpush1.msra.mxu0 %v654
      %672 = vmatprep.subr.mxu0 0.0
      %673 = vmatpush1.msra.mxu0 %v655
      %674 = vmatprep.subr.mxu0 0.0
      %675 = vmatpush1.msra.mxu0 %v656
      %676 = vmatprep.subr.mxu0 0.0
      %677 = vmatpush1.msra.mxu0 %v657
      %678 = vmatprep.subr.mxu0 0.0
      %679 = vmatpush1.msra.mxu0 %v658
      %680 = vmatprep.subr.mxu0 0.0
      %681 = vmatpush1.msra.mxu0 %v659
      %682 = vmatprep.subr.mxu0 0.0
      %683 = vmatpush1.msra.mxu0 %v660
      %684 = vmatprep.subr.mxu0 0.0
      %685 = vmatpush1.msra.mxu0 %v661
      %686 = vmatprep.subr.mxu0 0.0
      %687 = vmatpush1.msra.mxu0 %v662
      %688 = vmatprep.subr.mxu0 0.0
      %689 = vmatpush1.msra.mxu0 %v663
      %690 = vmatprep.subr.mxu0 0.0
      %691 = vmatpush1.msra.mxu0 %v664
      %692 = vmatprep.subr.mxu0 0.0
      %693 = vmatpush1.msra.mxu0 %v665
      %694 = vmatprep.subr.mxu0 0.0
      %695 = vmatpush1.msra.mxu0 0.0
      %696 = vmatprep.subr.mxu0 0.0
      %697 = vmatpush1.msra.mxu0 0.0
      %698 = vmatprep.subr.mxu0 0.0
      %699 = vmatpush1.msra.mxu0 0.0
      %700 = vmatprep.subr.mxu0 0.0
      %701 = vmatpush1.msra.mxu0 0.0
      %702 = vmatprep.subr.mxu0 0.0
      %703 = vmatpush1.msra.mxu0 0.0
      %704 = vmatprep.subr.mxu0 0.0
      %705 = vmatpush1.msra.mxu0 0.0
      %706 = vmatprep.subr.mxu0 0.0
      %707 = vmatpush1.msra.mxu0 0.0
      %708 = vmatprep.subr.mxu0 0.0
      %709 = vmatpush1.msra.mxu0 0.0
      %710 = vmatprep.subr.mxu0 0.0
      %711 = vmatpush1.msra.mxu0 0.0
      %712 = vmatprep.subr.mxu0 0.0
      %713 = vmatpush1.msra.mxu0 0.0
      %714 = vmatprep.subr.mxu0 0.0
      %715 = vmatpush1.msra.mxu0 0.0
      %716 = vmatprep.subr.mxu0 0.0
      %717 = vmatpush1.msra.mxu0 0.0
      %718 = vmatprep.subr.mxu0 0.0
      %719 = vmatpush1.msra.mxu0 0.0
      %720 = vmatprep.subr.mxu0 0.0
      %721 = vmatpush1.msra.mxu0 0.0
      %722 = vmatprep.subr.mxu0 0.0
      %723 = vmatpush1.msra.mxu0 0.0
      %724 = vmatprep.subr.mxu0 0.0
      %725 = vmatpush1.msra.mxu0 0.0
      %726 = vmatprep.subr.mxu0 0.0
      %727 = vmatpush1.msra.mxu0 0.0
      %728 = vmatprep.subr.mxu0 0.0
      %729 = vmatpush1.msra.mxu0 0.0
      %730 = vmatprep.subr.mxu0 0.0
      %731 = vmatpush1.msra.mxu0 0.0
      %732 = vmatprep.subr.mxu0 0.0
      %733 = vmatpush1.msra.mxu0 0.0
      %734 = vmatprep.mubr.f32.mxu0 0.0
      %735 = vmatmul.mubr.f32.gmra.mrb[0].mxu0 %v668
      %v736 = vpop.f32.mrb[0].mxu0
      %v737 = vadd.f32 0.0, %v736
      %v738 = vpop.f32.mrb[0].mxu0
      %739 = vdwg.mxu0
      %v740 = vld [vmem:[%s4] sm:$0xff]
      %v741 = vld [vmem:[%s4 + $0x8] sm:$0xff]
      %v742 = vld [vmem:[%s4 + $0x10] sm:$0xff]
      %v743 = vld [vmem:[%s4 + $0x18] sm:$0xff]
      %v744 = vld [vmem:[%s4 + $0x20] sm:$0xff]
      %v745 = vld [vmem:[%s4 + $0x28] sm:$0xff]
      %v746 = vld [vmem:[%s4 + $0x30] sm:$0xff]
      %v747 = vld [vmem:[%s4 + $0x38] sm:$0xff]
      %v748 = vld [vmem:[%s4 + $0x40] sm:$0xff]
      %v749 = vld [vmem:[%s4 + $0x48] sm:$0xff]
      %v750 = vld [vmem:[%s4 + $0x50] sm:$0xff]
      %v751 = vld [vmem:[%s4 + $0x58] sm:$0xff]
      %752 = vmatprep.subr.mxu0 0.0
      %753 = vmatpush1.msra.mxu0 %v740
      %754 = vmatprep.subr.mxu0 0.0
      %755 = vmatpush1.msra.mxu0 %v741
      %756 = vmatprep.subr.mxu0 0.0
      %757 = vmatpush1.msra.mxu0 %v742
      %758 = vmatprep.subr.mxu0 0.0
      %759 = vmatpush1.msra.mxu0 %v743
      %760 = vmatprep.subr.mxu0 0.0
      %761 = vmatpush1.msra.mxu0 %v744
      %762 = vmatprep.subr.mxu0 0.0
      %763 = vmatpush1.msra.mxu0 %v745
      %764 = vmatprep.subr.mxu0 0.0
      %765 = vmatpush1.msra.mxu0 %v746
      %766 = vmatprep.subr.mxu0 0.0
      %767 = vmatpush1.msra.mxu0 %v747
      %768 = vmatprep.subr.mxu0 0.0
      %769 = vmatpush1.msra.mxu0 %v748
      %770 = vmatprep.subr.mxu0 0.0
      %771 = vmatpush1.msra.mxu0 %v749
      %772 = vmatprep.subr.mxu0 0.0
      %773 = vmatpush1.msra.mxu0 %v750
      %774 = vmatprep.subr.mxu0 0.0
      %775 = vmatpush1.msra.mxu0 %v751
      %776 = vmatprep.subr.mxu0 0.0
      %777 = vmatpush1.msra.mxu0 0.0
      %778 = vmatprep.subr.mxu0 0.0
      %779 = vmatpush1.msra.mxu0 0.0
      %780 = vmatprep.subr.mxu0 0.0
      %781 = vmatpush1.msra.mxu0 0.0
      %782 = vmatprep.subr.mxu0 0.0
      %783 = vmatpush1.msra.mxu0 0.0
      %784 = vmatprep.subr.mxu0 0.0
      %785 = vmatpush1.msra.mxu0 0.0
      %786 = vmatprep.subr.mxu0 0.0
      %787 = vmatpush1.msra.mxu0 0.0
      %788 = vmatprep.subr.mxu0 0.0
      %789 = vmatpush1.msra.mxu0 0.0
      %790 = vmatprep.subr.mxu0 0.0
      %791 = vmatpush1.msra.mxu0 0.0
      %792 = vmatprep.subr.mxu0 0.0
      %793 = vmatpush1.msra.mxu0 0.0
      %794 = vmatprep.subr.mxu0 0.0
      %795 = vmatpush1.msra.mxu0 0.0
      %796 = vmatprep.subr.mxu0 0.0
      %797 = vmatpush1.msra.mxu0 0.0
      %798 = vmatprep.subr.mxu0 0.0
      %799 = vmatpush1.msra.mxu0 0.0
      %800 = vmatprep.subr.mxu0 0.0
      %801 = vmatpush1.msra.mxu0 0.0
      %802 = vmatprep.subr.mxu0 0.0
      %803 = vmatpush1.msra.mxu0 0.0
      %804 = vmatprep.subr.mxu0 0.0
      %805 = vmatpush1.msra.mxu0 0.0
      %806 = vmatprep.subr.mxu0 0.0
      %807 = vmatpush1.msra.mxu0 0.0
      %808 = vmatprep.subr.mxu0 0.0
      %809 = vmatpush1.msra.mxu0 0.0
      %810 = vmatprep.subr.mxu0 0.0
      %811 = vmatpush1.msra.mxu0 0.0
      %812 = vmatprep.subr.mxu0 0.0
      %813 = vmatpush1.msra.mxu0 0.0
      %814 = vmatprep.subr.mxu0 0.0
      %815 = vmatpush1.msra.mxu0 0.0
      %816 = vmatprep.mubr.f32.mxu0 0.0
      %817 = vmatmul.mubr.f32.gmra.mrb[0].mxu0 %v668
      %v818 = vpop.f32.mrb[0].mxu0
      %v819 = vadd.f32 0.0, %v818
      %v820 = vpop.f32.mrb[0].mxu0
      %821 = vdwg.mxu0
      %v822 = vmax.f32 %v737, %v819
      %vm823 = vcmp.ge.f32.partialorder %v822, 0.0
      %v824 = vmul.f32 %v822, 0.05
      %v825 = vsel %vm823, %v822, %v824
      %827 = vrot.lane.b32.xlu0 %v825, 127
      %v828 = vpop.permute.xlu0 %827
      %830 = vrot.lane.b32.xlu0 %v825, 126
      %v831 = vpop.permute.xlu0 %830
      %833 = vrot.lane.b32.xlu0 %v825, 125
      %v834 = vpop.permute.xlu0 %833
      %836 = vrot.lane.b32.xlu0 %v825, 124
      %v837 = vpop.permute.xlu0 %836
      %v839 = vld [vmem:[%s5] sm:$0xff]
      %v840 = vld [vmem:[%s5 + $0x8] sm:$0xff]
      %v841 = vld [vmem:[%s6] sm:$0xff]
      %v842 = vld [vmem:[%s6 + $0x8] sm:$0xff]
      %844 = vset.pattern.permute.xlu0 0
      %845 = vperm.xlu0 %844, %v841
      %v846 = vpop.permute.xlu0 %845
      %849 = vset.pattern.permute.xlu0 0
      %850 = vperm.xlu0 %849, %v842
      %v851 = vpop.permute.xlu0 %850
      %vm853 = vcmask 326656
      %v855 = vsel %vm853, %v839, 0
      %v858 = vsel %vm853, %v840, 0
      %860 = vmatprep.subr.mxu0 0.0
      %861 = vmatpush1.msra.mxu0 %v825
      %862 = vmatprep.subr.mxu0 0.0
      %863 = vmatpush1.msra.mxu0 %v828
      %864 = vmatprep.subr.mxu0 0.0
      %865 = vmatpush1.msra.mxu0 %v831
      %866 = vmatprep.subr.mxu0 0.0
      %867 = vmatpush1.msra.mxu0 %v834
      %868 = vmatprep.subr.mxu0 0.0
      %869 = vmatpush1.msra.mxu0 %v837
      %870 = vmatprep.subr.mxu0 0.0
      %871 = vmatpush1.msra.mxu0 0.0
      %872 = vmatprep.subr.mxu0 0.0
      %873 = vmatpush1.msra.mxu0 0.0
      %874 = vmatprep.subr.mxu0 0.0
      %875 = vmatpush1.msra.mxu0 0.0
      %876 = vmatprep.subr.mxu0 0.0
      %877 = vmatpush1.msra.mxu0 0.0
      %878 = vmatprep.subr.mxu0 0.0
      %879 = vmatpush1.msra.mxu0 0.0
      %880 = vmatprep.subr.mxu0 0.0
      %881 = vmatpush1.msra.mxu0 0.0
      %882 = vmatprep.subr.mxu0 0.0
      %883 = vmatpush1.msra.mxu0 0.0
      %884 = vmatprep.subr.mxu0 0.0
      %885 = vmatpush1.msra.mxu0 0.0
      %886 = vmatprep.subr.mxu0 0.0
      %887 = vmatpush1.msra.mxu0 0.0
      %888 = vmatprep.subr.mxu0 0.0
      %889 = vmatpush1.msra.mxu0 0.0
      %890 = vmatprep.subr.mxu0 0.0
      %891 = vmatpush1.msra.mxu0 0.0
      %892 = vmatprep.subr.mxu0 0.0
      %893 = vmatpush1.msra.mxu0 0.0
      %894 = vmatprep.subr.mxu0 0.0
      %895 = vmatpush1.msra.mxu0 0.0
      %896 = vmatprep.subr.mxu0 0.0
      %897 = vmatpush1.msra.mxu0 0.0
      %898 = vmatprep.subr.mxu0 0.0
      %899 = vmatpush1.msra.mxu0 0.0
      %900 = vmatprep.subr.mxu0 0.0
      %901 = vmatpush1.msra.mxu0 0.0
      %902 = vmatprep.subr.mxu0 0.0
      %903 = vmatpush1.msra.mxu0 0.0
      %904 = vmatprep.subr.mxu0 0.0
      %905 = vmatpush1.msra.mxu0 0.0
      %906 = vmatprep.subr.mxu0 0.0
      %907 = vmatpush1.msra.mxu0 0.0
      %908 = vmatprep.subr.mxu0 0.0
      %909 = vmatpush1.msra.mxu0 0.0
      %910 = vmatprep.subr.mxu0 0.0
      %911 = vmatpush1.msra.mxu0 0.0
      %912 = vmatprep.subr.mxu0 0.0
      %913 = vmatpush1.msra.mxu0 0.0
      %914 = vmatprep.subr.mxu0 0.0
      %915 = vmatpush1.msra.mxu0 0.0
      %916 = vmatprep.subr.mxu0 0.0
      %917 = vmatpush1.msra.mxu0 0.0
      %918 = vmatprep.subr.mxu0 0.0
      %919 = vmatpush1.msra.mxu0 0.0
      %920 = vmatprep.subr.mxu0 0.0
      %921 = vmatpush1.msra.mxu0 0.0
      %922 = vmatprep.subr.mxu0 0.0
      %923 = vmatpush1.msra.mxu0 0.0
      %924 = vmatprep.mubr.f32.mxu0 0.0
      %925 = vmatmul.mubr.f32.gmra.mrb[0].mxu0 %v855
      %v926 = vpop.f32.mrb[0].mxu0
      %v927 = vadd.f32 %v846, %v926
      %v928 = vpop.f32.mrb[0].mxu0
      %929 = vmatprep.mubr.f32.mxu0 0.0
      %930 = vmatmul.mubr.f32.gmra.mrb[0].mxu0 %v858
      %v931 = vpop.f32.mrb[0].mxu0
      %v932 = vadd.f32 %v851, %v931
      %v933 = vpop.f32.mrb[0].mxu0
      %934 = vdwg.mxu0
      %v935 = vld [vmem:[%s7] sm:$0xff]
      %v936 = vld [vmem:[%s7 + $0x8] sm:$0xff]
      %v937 = vld [vmem:[%s7 + $0x10] sm:$0xff]
      %v938 = vld [vmem:[%s7 + $0x18] sm:$0xff]
      %v939 = vld [vmem:[%s7 + $0x20] sm:$0xff]
      %v940 = vld [vmem:[%s7 + $0x28] sm:$0xff]
      %vm941 = vcmask 392192
      %v943 = vsel %vm941, %v927, 0
      %v946 = vsel %vm941, %v932, 0
      %948 = vmatprep.subr.mxu0 0.0
      %949 = vmatpush1.msra.mxu0 %v935
      %950 = vmatprep.subr.mxu0 0.0
      %951 = vmatpush1.msra.mxu0 %v936
      %952 = vmatprep.subr.mxu0 0.0
      %953 = vmatpush1.msra.mxu0 %v937
      %954 = vmatprep.subr.mxu0 0.0
      %955 = vmatpush1.msra.mxu0 %v938
      %956 = vmatprep.subr.mxu0 0.0
      %957 = vmatpush1.msra.mxu0 %v939
      %958 = vmatprep.subr.mxu0 0.0
      %959 = vmatpush1.msra.mxu0 %v940
      %960 = vmatprep.subr.mxu0 0.0
      %961 = vmatpush1.msra.mxu0 0.0
      %962 = vmatprep.subr.mxu0 0.0
      %963 = vmatpush1.msra.mxu0 0.0
      %964 = vmatprep.subr.mxu0 0.0
      %965 = vmatpush1.msra.mxu0 0.0
      %966 = vmatprep.subr.mxu0 0.0
      %967 = vmatpush1.msra.mxu0 0.0
      %968 = vmatprep.subr.mxu0 0.0
      %969 = vmatpush1.msra.mxu0 0.0
      %970 = vmatprep.subr.mxu0 0.0
      %971 = vmatpush1.msra.mxu0 0.0
      %972 = vmatprep.subr.mxu0 0.0
      %973 = vmatpush1.msra.mxu0 0.0
      %974 = vmatprep.subr.mxu0 0.0
      %975 = vmatpush1.msra.mxu0 0.0
      %976 = vmatprep.subr.mxu0 0.0
      %977 = vmatpush1.msra.mxu0 0.0
      %978 = vmatprep.subr.mxu0 0.0
      %979 = vmatpush1.msra.mxu0 0.0
      %980 = vmatprep.subr.mxu0 0.0
      %981 = vmatpush1.msra.mxu0 0.0
      %982 = vmatprep.subr.mxu0 0.0
      %983 = vmatpush1.msra.mxu0 0.0
      %984 = vmatprep.subr.mxu0 0.0
      %985 = vmatpush1.msra.mxu0 0.0
      %986 = vmatprep.subr.mxu0 0.0
      %987 = vmatpush1.msra.mxu0 0.0
      %988 = vmatprep.subr.mxu0 0.0
      %989 = vmatpush1.msra.mxu0 0.0
      %990 = vmatprep.subr.mxu0 0.0
      %991 = vmatpush1.msra.mxu0 0.0
      %992 = vmatprep.subr.mxu0 0.0
      %993 = vmatpush1.msra.mxu0 0.0
      %994 = vmatprep.subr.mxu0 0.0
      %995 = vmatpush1.msra.mxu0 0.0
      %996 = vmatprep.subr.mxu0 0.0
      %997 = vmatpush1.msra.mxu0 0.0
      %998 = vmatprep.subr.mxu0 0.0
      %999 = vmatpush1.msra.mxu0 0.0
      %1000 = vmatprep.subr.mxu0 0.0
      %1001 = vmatpush1.msra.mxu0 0.0
      %1002 = vmatprep.subr.mxu0 0.0
      %1003 = vmatpush1.msra.mxu0 0.0
      %1004 = vmatprep.subr.mxu0 0.0
      %1005 = vmatpush1.msra.mxu0 0.0
      %1006 = vmatprep.subr.mxu0 0.0
      %1007 = vmatpush1.msra.mxu0 0.0
      %1008 = vmatprep.subr.mxu0 0.0
      %1009 = vmatpush1.msra.mxu0 0.0
      %1010 = vmatprep.subr.mxu0 0.0
      %1011 = vmatpush1.msra.mxu0 0.0
      %1012 = vmatprep.mubr.f32.mxu0 0.0
      %1013 = vmatmul.mubr.f32.gmra.mrb[0].mxu0 %v943
      %v1014 = vpop.f32.mrb[0].mxu0
      %v1015 = vadd.f32 0.0, %v1014
      %v1016 = vpop.f32.mrb[0].mxu0
      %1017 = vmatprep.mubr.f32.mxu0 0.0
      %1018 = vmatmul.mubr.f32.gmra.mrb[0].mxu0 %v946
      %v1019 = vpop.f32.mrb[0].mxu0
      %v1020 = vadd.f32 0.0, %v1019
      %v1021 = vpop.f32.mrb[0].mxu0
      %1022 = vdwg.mxu0
      %v1023 = vld [vmem:[%s8] sm:$0xff]
      %v1024 = vld [vmem:[%s8 + $0x8] sm:$0xff]
      %v1025 = vld [vmem:[%s8 + $0x10] sm:$0xff]
      %v1026 = vld [vmem:[%s8 + $0x18] sm:$0xff]
      %v1027 = vld [vmem:[%s8 + $0x20] sm:$0xff]
      %v1028 = vld [vmem:[%s8 + $0x28] sm:$0xff]
      %1029 = vmatprep.subr.mxu0 0.0
      %1030 = vmatpush1.msra.mxu0 %v1023
      %1031 = vmatprep.subr.mxu0 0.0
      %1032 = vmatpush1.msra.mxu0 %v1024
      %1033 = vmatprep.subr.mxu0 0.0
      %1034 = vmatpush1.msra.mxu0 %v1025
      %1035 = vmatprep.subr.mxu0 0.0
      %1036 = vmatpush1.msra.mxu0 %v1026
      %1037 = vmatprep.subr.mxu0 0.0
      %1038 = vmatpush1.msra.mxu0 %v1027
      %1039 = vmatprep.subr.mxu0 0.0
      %1040 = vmatpush1.msra.mxu0 %v1028
      %1041 = vmatprep.subr.mxu0 0.0
      %1042 = vmatpush1.msra.mxu0 0.0
      %1043 = vmatprep.subr.mxu0 0.0
      %1044 = vmatpush1.msra.mxu0 0.0
      %1045 = vmatprep.subr.mxu0 0.0
      %1046 = vmatpush1.msra.mxu0 0.0
      %1047 = vmatprep.subr.mxu0 0.0
      %1048 = vmatpush1.msra.mxu0 0.0
      %1049 = vmatprep.subr.mxu0 0.0
      %1050 = vmatpush1.msra.mxu0 0.0
      %1051 = vmatprep.subr.mxu0 0.0
      %1052 = vmatpush1.msra.mxu0 0.0
      %1053 = vmatprep.subr.mxu0 0.0
      %1054 = vmatpush1.msra.mxu0 0.0
      %1055 = vmatprep.subr.mxu0 0.0
      %1056 = vmatpush1.msra.mxu0 0.0
      %1057 = vmatprep.subr.mxu0 0.0
      %1058 = vmatpush1.msra.mxu0 0.0
      %1059 = vmatprep.subr.mxu0 0.0
      %1060 = vmatpush1.msra.mxu0 0.0
      %1061 = vmatprep.subr.mxu0 0.0
      %1062 = vmatpush1.msra.mxu0 0.0
      %1063 = vmatprep.subr.mxu0 0.0
      %1064 = vmatpush1.msra.mxu0 0.0
      %1065 = vmatprep.subr.mxu0 0.0
      %1066 = vmatpush1.msra.mxu0 0.0
      %1067 = vmatprep.subr.mxu0 0.0
      %1068 = vmatpush1.msra.mxu0 0.0
      %1069 = vmatprep.subr.mxu0 0.0
      %1070 = vmatpush1.msra.mxu0 0.0
      %1071 = vmatprep.subr.mxu0 0.0
      %1072 = vmatpush1.msra.mxu0 0.0
      %1073 = vmatprep.subr.mxu0 0.0
      %1074 = vmatpush1.msra.mxu0 0.0
      %1075 = vmatprep.subr.mxu0 0.0
      %1076 = vmatpush1.msra.mxu0 0.0
      %1077 = vmatprep.subr.mxu0 0.0
      %1078 = vmatpush1.msra.mxu0 0.0
      %1079 = vmatprep.subr.mxu0 0.0
      %1080 = vmatpush1.msra.mxu0 0.0
      %1081 = vmatprep.subr.mxu0 0.0
      %1082 = vmatpush1.msra.mxu0 0.0
      %1083 = vmatprep.subr.mxu0 0.0
      %1084 = vmatpush1.msra.mxu0 0.0
      %1085 = vmatprep.subr.mxu0 0.0
      %1086 = vmatpush1.msra.mxu0 0.0
      %1087 = vmatprep.subr.mxu0 0.0
      %1088 = vmatpush1.msra.mxu0 0.0
      %1089 = vmatprep.subr.mxu0 0.0
      %1090 = vmatpush1.msra.mxu0 0.0
      %1091 = vmatprep.subr.mxu0 0.0
      %1092 = vmatpush1.msra.mxu0 0.0
      %1093 = vmatprep.mubr.f32.mxu0 0.0
      %1094 = vmatmul.mubr.f32.gmra.mrb[0].mxu0 %v943
      %v1095 = vpop.f32.mrb[0].mxu0
      %v1096 = vadd.f32 0.0, %v1095
      %v1097 = vpop.f32.mrb[0].mxu0
      %1098 = vmatprep.mubr.f32.mxu0 0.0
      %1099 = vmatmul.mubr.f32.gmra.mrb[0].mxu0 %v946
      %v1100 = vpop.f32.mrb[0].mxu0
      %v1101 = vadd.f32 0.0, %v1100
      %v1102 = vpop.f32.mrb[0].mxu0
      %1103 = vdwg.mxu0
      %v1104 = vmax.f32 %v1015, %v1096
      %v1105 = vmax.f32 %v1020, %v1101
      %vm1106 = vcmp.ge.f32.partialorder %v1104, 0.0
      %vm1107 = vcmp.ge.f32.partialorder %v1105, 0.0
      %v1108 = vmul.f32 %v1104, 0.05
      %v1109 = vmul.f32 %v1105, 0.05
      %v1110 = vsel %vm1106, %v1104, %v1108
      %v1111 = vsel %vm1107, %v1105, %v1109
      %1114 = vrot.lane.b32.xlu0 %v1110, 127
      %v1115 = vpop.permute.xlu0 %1114
      %1116 = vrot.lane.b32.xlu0 %v1111, 127
      %v1117 = vpop.permute.xlu0 %1116
      %1120 = vrot.lane.b32.xlu0 %v1110, 126
      %v1121 = vpop.permute.xlu0 %1120
      %1122 = vrot.lane.b32.xlu0 %v1111, 126
      %v1123 = vpop.permute.xlu0 %1122
      %1126 = vrot.lane.b32.xlu0 %v1110, 125
      %v1127 = vpop.permute.xlu0 %1126
      %1128 = vrot.lane.b32.xlu0 %v1111, 125
      %v1129 = vpop.permute.xlu0 %1128
      %1132 = vrot.lane.b32.xlu0 %v1110, 124
      %v1133 = vpop.permute.xlu0 %1132
      %1134 = vrot.lane.b32.xlu0 %v1111, 124
      %v1135 = vpop.permute.xlu0 %1134
      %v1138 = vld [vmem:[%s9] sm:$0xff]
      %v1139 = vld [vmem:[%s9 + $0x8] sm:$0xff]
      %v1140 = vld [vmem:[%s9 + $0x10] sm:$0xff]
      %v1141 = vld [vmem:[%s9 + $0x18] sm:$0xff]
      %v1142 = vld [vmem:[%s10] sm:$0xff]
      %v1143 = vld [vmem:[%s10 + $0x8] sm:$0xff]
      %v1144 = vld [vmem:[%s10 + $0x10] sm:$0xff]
      %v1145 = vld [vmem:[%s10 + $0x18] sm:$0xff]
      %1147 = vset.pattern.permute.xlu0 0
      %1148 = vperm.xlu0 %1147, %v1142
      %v1149 = vpop.permute.xlu0 %1148
      %1152 = vset.pattern.permute.xlu0 0
      %1153 = vperm.xlu0 %1152, %v1143
      %v1154 = vpop.permute.xlu0 %1153
      %1157 = vset.pattern.permute.xlu0 0
      %1158 = vperm.xlu0 %1157, %v1144
      %v1159 = vpop.permute.xlu0 %1158
      %1162 = vset.pattern.permute.xlu0 0
      %1163 = vperm.xlu0 %1162, %v1145
      %v1164 = vpop.permute.xlu0 %1163
      %vm1166 = vcmask 654336
      %v1168 = vsel %vm1166, %v1138, 0
      %v1171 = vsel %vm1166, %v1139, 0
      %v1174 = vsel %vm1166, %v1140, 0
      %v1177 = vsel %vm1166, %v1141, 0
      %1179 = vmatprep.subr.mxu0 0.0
      %1180 = vmatpush1.msra.mxu0 %v1110
      %1181 = vmatprep.subr.mxu0 0.0
      %1182 = vmatpush1.msra.mxu0 %v1111
      %1183 = vmatprep.subr.mxu0 0.0
      %1184 = vmatpush1.msra.mxu0 %v1115
      %1185 = vmatprep.subr.mxu0 0.0
      %1186 = vmatpush1.msra.mxu0 %v1117
      %1187 = vmatprep.subr.mxu0 0.0
      %1188 = vmatpush1.msra.mxu0 %v1121
      %1189 = vmatprep.subr.mxu0 0.0
      %1190 = vmatpush1.msra.mxu0 %v1123
      %1191 = vmatprep.subr.mxu0 0.0
      %1192 = vmatpush1.msra.mxu0 %v1127
      %1193 = vmatprep.subr.mxu0 0.0
      %1194 = vmatpush1.msra.mxu0 %v1129
      %1195 = vmatprep.subr.mxu0 0.0
      %1196 = vmatpush1.msra.mxu0 %v1133
      %1197 = vmatprep.subr.mxu0 0.0
      %1198 = vmatpush1.msra.mxu0 %v1135
      %1199 = vmatprep.subr.mxu0 0.0
      %1200 = vmatpush1.msra.mxu0 0.0
      %1201 = vmatprep.subr.mxu0 0.0
      %1202 = vmatpush1.msra.mxu0 0.0
      %1203 = vmatprep.subr.mxu0 0.0
      %1204 = vmatpush1.msra.mxu0 0.0
      %1205 = vmatprep.subr.mxu0 0.0
      %1206 = vmatpush1.msra.mxu0 0.0
      %1207 = vmatprep.subr.mxu0 0.0
      %1208 = vmatpush1.msra.mxu0 0.0
      %1209 = vmatprep.subr.mxu0 0.0
      %1210 = vmatpush1.msra.mxu0 0.0
      %1211 = vmatprep.subr.mxu0 0.0
      %1212 = vmatpush1.msra.mxu0 0.0
      %1213 = vmatprep.subr.mxu0 0.0
      %1214 = vmatpush1.msra.mxu0 0.0
      %1215 = vmatprep.subr.mxu0 0.0
      %1216 = vmatpush1.msra.mxu0 0.0
      %1217 = vmatprep.subr.mxu0 0.0
      %1218 = vmatpush1.msra.mxu0 0.0
      %1219 = vmatprep.subr.mxu0 0.0
      %1220 = vmatpush1.msra.mxu0 0.0
      %1221 = vmatprep.subr.mxu0 0.0
      %1222 = vmatpush1.msra.mxu0 0.0
      %1223 = vmatprep.subr.mxu0 0.0
      %1224 = vmatpush1.msra.mxu0 0.0
      %1225 = vmatprep.subr.mxu0 0.0
      %1226 = vmatpush1.msra.mxu0 0.0
      %1227 = vmatprep.subr.mxu0 0.0
      %1228 = vmatpush1.msra.mxu0 0.0
      %1229 = vmatprep.subr.mxu0 0.0
      %1230 = vmatpush1.msra.mxu0 0.0
      %1231 = vmatprep.subr.mxu0 0.0
      %1232 = vmatpush1.msra.mxu0 0.0
      %1233 = vmatprep.subr.mxu0 0.0
      %1234 = vmatpush1.msra.mxu0 0.0
      %1235 = vmatprep.subr.mxu0 0.0
      %1236 = vmatpush1.msra.mxu0 0.0
      %1237 = vmatprep.subr.mxu0 0.0
      %1238 = vmatpush1.msra.mxu0 0.0
      %1239 = vmatprep.subr.mxu0 0.0
      %1240 = vmatpush1.msra.mxu0 0.0
      %1241 = vmatprep.subr.mxu0 0.0
      %1242 = vmatpush1.msra.mxu0 0.0
      %1243 = vmatprep.mubr.f32.mxu0 0.0
      %1244 = vmatmul.mubr.f32.gmra.mrb[0].mxu0 %v1168
      %v1245 = vpop.f32.mrb[0].mxu0
      %v1246 = vadd.f32 %v1149, %v1245
      %v1247 = vpop.f32.mrb[0].mxu0
      %1248 = vmatprep.mubr.f32.mxu0 0.0
      %1249 = vmatmul.mubr.f32.gmra.mrb[0].mxu0 %v1171
      %v1250 = vpop.f32.mrb[0].mxu0
      %v1251 = vadd.f32 %v1154, %v1250
      %v1252 = vpop.f32.mrb[0].mxu0
      %1253 = vmatprep.mubr.f32.mxu0 0.0
      %1254 = vmatmul.mubr.f32.gmra.mrb[0].mxu0 %v1174
      %v1255 = vpop.f32.mrb[0].mxu0
      %v1256 = vadd.f32 %v1159, %v1255
      %v1257 = vpop.f32.mrb[0].mxu0
      %1258 = vmatprep.mubr.f32.mxu0 0.0
      %1259 = vmatmul.mubr.f32.gmra.mrb[0].mxu0 %v1177
      %v1260 = vpop.f32.mrb[0].mxu0
      %v1261 = vadd.f32 %v1164, %v1260
      %v1262 = vpop.f32.mrb[0].mxu0
      %1263 = vdwg.mxu0
      %v1264 = vld [vmem:[%s11] sm:$0xff]
      %v1265 = vld [vmem:[%s11 + $0x8] sm:$0xff]
      %vm1266 = vcmask 130048
      %v1268 = vsel %vm1266, %v1246, 0
      %v1271 = vsel %vm1266, %v1251, 0
      %v1274 = vsel %vm1266, %v1256, 0
      %v1277 = vsel %vm1266, %v1261, 0
      %1279 = vmatprep.subr.mxu0 0.0
      %1280 = vmatpush1.msra.mxu0 %v1264
      %1281 = vmatprep.subr.mxu0 0.0
      %1282 = vmatpush1.msra.mxu0 %v1265
      %1283 = vmatprep.subr.mxu0 0.0
      %1284 = vmatpush1.msra.mxu0 0.0
      %1285 = vmatprep.subr.mxu0 0.0
      %1286 = vmatpush1.msra.mxu0 0.0
      %1287 = vmatprep.subr.mxu0 0.0
      %1288 = vmatpush1.msra.mxu0 0.0
      %1289 = vmatprep.subr.mxu0 0.0
      %1290 = vmatpush1.msra.mxu0 0.0
      %1291 = vmatprep.subr.mxu0 0.0
      %1292 = vmatpush1.msra.mxu0 0.0
      %1293 = vmatprep.subr.mxu0 0.0
      %1294 = vmatpush1.msra.mxu0 0.0
      %1295 = vmatprep.subr.mxu0 0.0
      %1296 = vmatpush1.msra.mxu0 0.0
      %1297 = vmatprep.subr.mxu0 0.0
      %1298 = vmatpush1.msra.mxu0 0.0
      %1299 = vmatprep.subr.mxu0 0.0
      %1300 = vmatpush1.msra.mxu0 0.0
      %1301 = vmatprep.subr.mxu0 0.0
      %1302 = vmatpush1.msra.mxu0 0.0
      %1303 = vmatprep.subr.mxu0 0.0
      %1304 = vmatpush1.msra.mxu0 0.0
      %1305 = vmatprep.subr.mxu0 0.0
      %1306 = vmatpush1.msra.mxu0 0.0
      %1307 = vmatprep.subr.mxu0 0.0
      %1308 = vmatpush1.msra.mxu0 0.0
      %1309 = vmatprep.subr.mxu0 0.0
      %1310 = vmatpush1.msra.mxu0 0.0
      %1311 = vmatprep.subr.mxu0 0.0
      %1312 = vmatpush1.msra.mxu0 0.0
      %1313 = vmatprep.subr.mxu0 0.0
      %1314 = vmatpush1.msra.mxu0 0.0
      %1315 = vmatprep.subr.mxu0 0.0
      %1316 = vmatpush1.msra.mxu0 0.0
      %1317 = vmatprep.subr.mxu0 0.0
      %1318 = vmatpush1.msra.mxu0 0.0
      %1319 = vmatprep.subr.mxu0 0.0
      %1320 = vmatpush1.msra.mxu0 0.0
      %1321 = vmatprep.subr.mxu0 0.0
      %1322 = vmatpush1.msra.mxu0 0.0
      %1323 = vmatprep.subr.mxu0 0.0
      %1324 = vmatpush1.msra.mxu0 0.0
      %1325 = vmatprep.subr.mxu0 0.0
      %1326 = vmatpush1.msra.mxu0 0.0
      %1327 = vmatprep.subr.mxu0 0.0
      %1328 = vmatpush1.msra.mxu0 0.0
      %1329 = vmatprep.subr.mxu0 0.0
      %1330 = vmatpush1.msra.mxu0 0.0
      %1331 = vmatprep.subr.mxu0 0.0
      %1332 = vmatpush1.msra.mxu0 0.0
      %1333 = vmatprep.subr.mxu0 0.0
      %1334 = vmatpush1.msra.mxu0 0.0
      %1335 = vmatprep.subr.mxu0 0.0
      %1336 = vmatpush1.msra.mxu0 0.0
      %1337 = vmatprep.subr.mxu0 0.0
      %1338 = vmatpush1.msra.mxu0 0.0
      %1339 = vmatprep.subr.mxu0 0.0
      %1340 = vmatpush1.msra.mxu0 0.0
      %1341 = vmatprep.subr.mxu0 0.0
      %1342 = vmatpush1.msra.mxu0 0.0
      %1343 = vmatprep.mubr.f32.mxu0 0.0
      %1344 = vmatmul.mubr.f32.gmra.mrb[0].mxu0 %v1268
      %v1345 = vpop.f32.mrb[0].mxu0
      %v1346 = vadd.f32 0.0, %v1345
      %v1347 = vpop.f32.mrb[0].mxu0
      %1348 = vmatprep.mubr.f32.mxu0 0.0
      %1349 = vmatmul.mubr.f32.gmra.mrb[0].mxu0 %v1271
      %v1350 = vpop.f32.mrb[0].mxu0
      %v1351 = vadd.f32 0.0, %v1350
      %v1352 = vpop.f32.mrb[0].mxu0
      %1353 = vmatprep.mubr.f32.mxu0 0.0
      %1354 = vmatmul.mubr.f32.gmra.mrb[0].mxu0 %v1274
      %v1355 = vpop.f32.mrb[0].mxu0
      %v1356 = vadd.f32 0.0, %v1355
      %v1357 = vpop.f32.mrb[0].mxu0
      %1358 = vmatprep.mubr.f32.mxu0 0.0
      %1359 = vmatmul.mubr.f32.gmra.mrb[0].mxu0 %v1277
      %v1360 = vpop.f32.mrb[0].mxu0
      %v1361 = vadd.f32 0.0, %v1360
      %v1362 = vpop.f32.mrb[0].mxu0
      %1363 = vdwg.mxu0
      %v1364 = vld [vmem:[%s12] sm:$0xff]
      %v1365 = vld [vmem:[%s12 + $0x8] sm:$0xff]
      %1366 = vmatprep.subr.mxu0 0.0
      %1367 = vmatpush1.msra.mxu0 %v1364
      %1368 = vmatprep.subr.mxu0 0.0
      %1369 = vmatpush1.msra.mxu0 %v1365
      %1370 = vmatprep.subr.mxu0 0.0
      %1371 = vmatpush1.msra.mxu0 0.0
      %1372 = vmatprep.subr.mxu0 0.0
      %1373 = vmatpush1.msra.mxu0 0.0
      %1374 = vmatprep.subr.mxu0 0.0
      %1375 = vmatpush1.msra.mxu0 0.0
      %1376 = vmatprep.subr.mxu0 0.0
      %1377 = vmatpush1.msra.mxu0 0.0
      %1378 = vmatprep.subr.mxu0 0.0
      %1379 = vmatpush1.msra.mxu0 0.0
      %1380 = vmatprep.subr.mxu0 0.0
      %1381 = vmatpush1.msra.mxu0 0.0
      %1382 = vmatprep.subr.mxu0 0.0
      %1383 = vmatpush1.msra.mxu0 0.0
      %1384 = vmatprep.subr.mxu0 0.0
      %1385 = vmatpush1.msra.mxu0 0.0
      %1386 = vmatprep.subr.mxu0 0.0
      %1387 = vmatpush1.msra.mxu0 0.0
      %1388 = vmatprep.subr.mxu0 0.0
      %1389 = vmatpush1.msra.mxu0 0.0
      %1390 = vmatprep.subr.mxu0 0.0
      %1391 = vmatpush1.msra.mxu0 0.0
      %1392 = vmatprep.subr.mxu0 0.0
      %1393 = vmatpush1.msra.mxu0 0.0
      %1394 = vmatprep.subr.mxu0 0.0
      %1395 = vmatpush1.msra.mxu0 0.0
      %1396 = vmatprep.subr.mxu0 0.0
      %1397 = vmatpush1.msra.mxu0 0.0
      %1398 = vmatprep.subr.mxu0 0.0
      %1399 = vmatpush1.msra.mxu0 0.0
      %1400 = vmatprep.subr.mxu0 0.0
      %1401 = vmatpush1.msra.mxu0 0.0
      %1402 = vmatprep.subr.mxu0 0.0
      %1403 = vmatpush1.msra.mxu0 0.0
      %1404 = vmatprep.subr.mxu0 0.0
      %1405 = vmatpush1.msra.mxu0 0.0
      %1406 = vmatprep.subr.mxu0 0.0
      %1407 = vmatpush1.msra.mxu0 0.0
      %1408 = vmatprep.subr.mxu0 0.0
      %1409 = vmatpush1.msra.mxu0 0.0
      %1410 = vmatprep.subr.mxu0 0.0
      %1411 = vmatpush1.msra.mxu0 0.0
      %1412 = vmatprep.subr.mxu0 0.0
      %1413 = vmatpush1.msra.mxu0 0.0
      %1414 = vmatprep.subr.mxu0 0.0
      %1415 = vmatpush1.msra.mxu0 0.0
      %1416 = vmatprep.subr.mxu0 0.0
      %1417 = vmatpush1.msra.mxu0 0.0
      %1418 = vmatprep.subr.mxu0 0.0
      %1419 = vmatpush1.msra.mxu0 0.0
      %1420 = vmatprep.subr.mxu0 0.0
      %1421 = vmatpush1.msra.mxu0 0.0
      %1422 = vmatprep.subr.mxu0 0.0
      %1423 = vmatpush1.msra.mxu0 0.0
      %1424 = vmatprep.subr.mxu0 0.0
      %1425 = vmatpush1.msra.mxu0 0.0
      %1426 = vmatprep.subr.mxu0 0.0
      %1427 = vmatpush1.msra.mxu0 0.0
      %1428 = vmatprep.subr.mxu0 0.0
      %1429 = vmatpush1.msra.mxu0 0.0
      %1430 = vmatprep.mubr.f32.mxu0 0.0
      %1431 = vmatmul.mubr.f32.gmra.mrb[0].mxu0 %v1268
      %v1432 = vpop.f32.mrb[0].mxu0
      %v1433 = vadd.f32 0.0, %v1432
      %v1434 = vpop.f32.mrb[0].mxu0
      %1435 = vmatprep.mubr.f32.mxu0 0.0
      %1436 = vmatmul.mubr.f32.gmra.mrb[0].mxu0 %v1271
      %v1437 = vpop.f32.mrb[0].mxu0
      %v1438 = vadd.f32 0.0, %v1437
      %v1439 = vpop.f32.mrb[0].mxu0
      %1440 = vmatprep.mubr.f32.mxu0 0.0
      %1441 = vmatmul.mubr.f32.gmra.mrb[0].mxu0 %v1274
      %v1442 = vpop.f32.mrb[0].mxu0
      %v1443 = vadd.f32 0.0, %v1442
      %v1444 = vpop.f32.mrb[0].mxu0
      %1445 = vmatprep.mubr.f32.mxu0 0.0
      %1446 = vmatmul.mubr.f32.gmra.mrb[0].mxu0 %v1277
      %v1447 = vpop.f32.mrb[0].mxu0
      %v1448 = vadd.f32 0.0, %v1447
      %v1449 = vpop.f32.mrb[0].mxu0
      %1450 = vdwg.mxu0
      %v1451 = vmax.f32 %v1346, %v1433
      %v1452 = vmax.f32 %v1351, %v1438
      %v1453 = vmax.f32 %v1356, %v1443
      %v1454 = vmax.f32 %v1361, %v1448
      %vm1455 = vcmp.ge.f32.partialorder %v1451, 0.0
      %vm1456 = vcmp.ge.f32.partialorder %v1452, 0.0
      %vm1457 = vcmp.ge.f32.partialorder %v1453, 0.0
      %vm1458 = vcmp.ge.f32.partialorder %v1454, 0.0
      %v1459 = vmul.f32 %v1451, 0.05
      %v1460 = vmul.f32 %v1452, 0.05
      %v1461 = vmul.f32 %v1453, 0.05
      %v1462 = vmul.f32 %v1454, 0.05
      %v1463 = vsel %vm1455, %v1451, %v1459
      %v1464 = vsel %vm1456, %v1452, %v1460
      %v1465 = vsel %vm1457, %v1453, %v1461
      %v1466 = vsel %vm1458, %v1454, %v1462
      %1471 = vrot.lane.b32.xlu0 %v1463, 127
      %v1472 = vpop.permute.xlu0 %1471
      %1473 = vrot.lane.b32.xlu0 %v1464, 127
      %v1474 = vpop.permute.xlu0 %1473
      %1475 = vrot.lane.b32.xlu0 %v1465, 127
      %v1476 = vpop.permute.xlu0 %1475
      %1477 = vrot.lane.b32.xlu0 %v1466, 127
      %v1478 = vpop.permute.xlu0 %1477
      %1483 = vrot.lane.b32.xlu0 %v1463, 126
      %v1484 = vpop.permute.xlu0 %1483
      %1485 = vrot.lane.b32.xlu0 %v1464, 126
      %v1486 = vpop.permute.xlu0 %1485
      %1487 = vrot.lane.b32.xlu0 %v1465, 126
      %v1488 = vpop.permute.xlu0 %1487
      %1489 = vrot.lane.b32.xlu0 %v1466, 126
      %v1490 = vpop.permute.xlu0 %1489
      %1495 = vrot.lane.b32.xlu0 %v1463, 125
      %v1496 = vpop.permute.xlu0 %1495
      %1497 = vrot.lane.b32.xlu0 %v1464, 125
      %v1498 = vpop.permute.xlu0 %1497
      %1499 = vrot.lane.b32.xlu0 %v1465, 125
      %v1500 = vpop.permute.xlu0 %1499
      %1501 = vrot.lane.b32.xlu0 %v1466, 125
      %v1502 = vpop.permute.xlu0 %1501
      %1507 = vrot.lane.b32.xlu0 %v1463, 124
      %v1508 = vpop.permute.xlu0 %1507
      %1509 = vrot.lane.b32.xlu0 %v1464, 124
      %v1510 = vpop.permute.xlu0 %1509
      %1511 = vrot.lane.b32.xlu0 %v1465, 124
      %v1512 = vpop.permute.xlu0 %1511
      %1513 = vrot.lane.b32.xlu0 %v1466, 124
      %v1514 = vpop.permute.xlu0 %1513
      %v1519 = vld [vmem:[%s13] sm:$0xff]
      %v1520 = vld [vmem:[%s13 + $0x8] sm:$0xff]
      %v1521 = vld [vmem:[%s13 + $0x10] sm:$0xff]
      %v1522 = vld [vmem:[%s13 + $0x18] sm:$0xff]
      %v1523 = vld [vmem:[%s13 + $0x20] sm:$0xff]
      %v1524 = vld [vmem:[%s13 + $0x28] sm:$0xff]
      %v1525 = vld [vmem:[%s13 + $0x30] sm:$0xff]
      %v1526 = vld [vmem:[%s13 + $0x38] sm:$0xff]
      %v1527 = vld [vmem:[%s13 + $0x40] sm:$0xff]
      %v1528 = vld [vmem:[%s13 + $0x48] sm:$0xff]
      %v1529 = vld [vmem:[%s13 + $0x50] sm:$0xff]
      %v1530 = vld [vmem:[%s13 + $0x58] sm:$0xff]
      %v1531 = vld [vmem:[%s13 + $0x60] sm:$0xff]
      %v1532 = vld [vmem:[%s13 + $0x68] sm:$0xff]
      %v1533 = vld [vmem:[%s13 + $0x70] sm:$0xff]
      %v1534 = vld [vmem:[%s13 + $0x78] sm:$0xff]
      %v1535 = vld [vmem:[%s14] sm:$0xff]
      %v1536 = vld [vmem:[%s14 + $0x8] sm:$0xff]
      %v1537 = vld [vmem:[%s14 + $0x10] sm:$0xff]
      %v1538 = vld [vmem:[%s14 + $0x18] sm:$0xff]
      %v1539 = vld [vmem:[%s14 + $0x20] sm:$0xff]
      %v1540 = vld [vmem:[%s14 + $0x28] sm:$0xff]
      %v1541 = vld [vmem:[%s14 + $0x30] sm:$0xff]
      %v1542 = vld [vmem:[%s14 + $0x38] sm:$0xff]
      %1544 = vset.pattern.permute.xlu0 0
      %1545 = vperm.xlu0 %1544, %v1535
      %v1546 = vpop.permute.xlu0 %1545
      %1549 = vset.pattern.permute.xlu0 0
      %1550 = vperm.xlu0 %1549, %v1536
      %v1551 = vpop.permute.xlu0 %1550
      %1554 = vset.pattern.permute.xlu0 0
      %1555 = vperm.xlu0 %1554, %v1537
      %v1556 = vpop.permute.xlu0 %1555
      %1559 = vset.pattern.permute.xlu0 0
      %1560 = vperm.xlu0 %1559, %v1538
      %v1561 = vpop.permute.xlu0 %1560
      %1564 = vset.pattern.permute.xlu0 0
      %1565 = vperm.xlu0 %1564, %v1539
      %v1566 = vpop.permute.xlu0 %1565
      %1569 = vset.pattern.permute.xlu0 0
      %1570 = vperm.xlu0 %1569, %v1540
      %v1571 = vpop.permute.xlu0 %1570
      %1574 = vset.pattern.permute.xlu0 0
      %1575 = vperm.xlu0 %1574, %v1541
      %v1576 = vpop.permute.xlu0 %1575
      %1579 = vset.pattern.permute.xlu0 0
      %1580 = vperm.xlu0 %1579, %v1542
      %v1581 = vpop.permute.xlu0 %1580
      %vm1583 = vcmask 261120
      %v1585 = vsel %vm1583, %v1520, 0
      %v1588 = vsel %vm1583, %v1522, 0
      %v1591 = vsel %vm1583, %v1524, 0
      %v1594 = vsel %vm1583, %v1526, 0
      %v1597 = vsel %vm1583, %v1528, 0
      %v1600 = vsel %vm1583, %v1530, 0
      %v1603 = vsel %vm1583, %v1532, 0
      %v1606 = vsel %vm1583, %v1534, 0
      %1608 = vmatprep.subr.mxu0 0.0
      %1609 = vmatpush1.msra.mxu0 %v1463
      %1610 = vmatprep.subr.mxu0 0.0
      %1611 = vmatpush1.msra.mxu0 %v1464
      %1612 = vmatprep.subr.mxu0 0.0
      %1613 = vmatpush1.msra.mxu0 %v1465
      %1614 = vmatprep.subr.mxu0 0.0
      %1615 = vmatpush1.msra.mxu0 %v1466
      %1616 = vmatprep.subr.mxu0 0.0
      %1617 = vmatpush1.msra.mxu0 %v1472
      %1618 = vmatprep.subr.mxu0 0.0
      %1619 = vmatpush1.msra.mxu0 %v1474
      %1620 = vmatprep.subr.mxu0 0.0
      %1621 = vmatpush1.msra.mxu0 %v1476
      %1622 = vmatprep.subr.mxu0 0.0
      %1623 = vmatpush1.msra.mxu0 %v1478
      %1624 = vmatprep.subr.mxu0 0.0
      %1625 = vmatpush1.msra.mxu0 %v1484
      %1626 = vmatprep.subr.mxu0 0.0
      %1627 = vmatpush1.msra.mxu0 %v1486
      %1628 = vmatprep.subr.mxu0 0.0
      %1629 = vmatpush1.msra.mxu0 %v1488
      %1630 = vmatprep.subr.mxu0 0.0
      %1631 = vmatpush1.msra.mxu0 %v1490
      %1632 = vmatprep.subr.mxu0 0.0
      %1633 = vmatpush1.msra.mxu0 %v1496
      %1634 = vmatprep.subr.mxu0 0.0
      %1635 = vmatpush1.msra.mxu0 %v1498
      %1636 = vmatprep.subr.mxu0 0.0
      %1637 = vmatpush1.msra.mxu0 %v1500
      %1638 = vmatprep.subr.mxu0 0.0
      %1639 = vmatpush1.msra.mxu0 %v1502
      %1640 = vmatprep.subr.mxu0 0.0
      %1641 = vmatpush1.msra.mxu0 %v1508
      %1642 = vmatprep.subr.mxu0 0.0
      %1643 = vmatpush1.msra.mxu0 %v1510
      %1644 = vmatprep.subr.mxu0 0.0
      %1645 = vmatpush1.msra.mxu0 %v1512
      %1646 = vmatprep.subr.mxu0 0.0
      %1647 = vmatpush1.msra.mxu0 %v1514
      %1648 = vmatprep.subr.mxu0 0.0
      %1649 = vmatpush1.msra.mxu0 0.0
      %1650 = vmatprep.subr.mxu0 0.0
      %1651 = vmatpush1.msra.mxu0 0.0
      %1652 = vmatprep.subr.mxu0 0.0
      %1653 = vmatpush1.msra.mxu0 0.0
      %1654 = vmatprep.subr.mxu0 0.0
      %1655 = vmatpush1.msra.mxu0 0.0
      %1656 = vmatprep.subr.mxu0 0.0
      %1657 = vmatpush1.msra.mxu0 0.0
      %1658 = vmatprep.subr.mxu0 0.0
      %1659 = vmatpush1.msra.mxu0 0.0
      %1660 = vmatprep.subr.mxu0 0.0
      %1661 = vmatpush1.msra.mxu0 0.0
      %1662 = vmatprep.subr.mxu0 0.0
      %1663 = vmatpush1.msra.mxu0 0.0
      %1664 = vmatprep.subr.mxu0 0.0
      %1665 = vmatpush1.msra.mxu0 0.0
      %1666 = vmatprep.subr.mxu0 0.0
      %1667 = vmatpush1.msra.mxu0 0.0
      %1668 = vmatprep.subr.mxu0 0.0
      %1669 = vmatpush1.msra.mxu0 0.0
      %1670 = vmatprep.subr.mxu0 0.0
      %1671 = vmatpush1.msra.mxu0 0.0
      %1672 = vmatprep.mubr.f32.mxu0 %v1585
      %1673 = vmatmul.mubr.f32.gmra.mrb[0].mxu0 %v1519
      %v1674 = vpop.f32.mrb[0].mxu0
      %v1675 = vadd.f32 %v1546, %v1674
      %v1676 = vpop.f32.mrb[0].mxu0
      %1677 = vmatprep.mubr.f32.mxu0 %v1588
      %1678 = vmatmul.mubr.f32.gmra.mrb[0].mxu0 %v1521
      %v1679 = vpop.f32.mrb[0].mxu0
      %v1680 = vadd.f32 %v1551, %v1679
      %v1681 = vpop.f32.mrb[0].mxu0
      %1682 = vmatprep.mubr.f32.mxu0 %v1591
      %1683 = vmatmul.mubr.f32.gmra.mrb[0].mxu0 %v1523
      %v1684 = vpop.f32.mrb[0].mxu0
      %v1685 = vadd.f32 %v1556, %v1684
      %v1686 = vpop.f32.mrb[0].mxu0
      %1687 = vmatprep.mubr.f32.mxu0 %v1594
      %1688 = vmatmul.mubr.f32.gmra.mrb[0].mxu0 %v1525
      %v1689 = vpop.f32.mrb[0].mxu0
      %v1690 = vadd.f32 %v1561, %v1689
      %v1691 = vpop.f32.mrb[0].mxu0
      %1692 = vmatprep.mubr.f32.mxu0 %v1597
      %1693 = vmatmul.mubr.f32.gmra.mrb[0].mxu0 %v1527
      %v1694 = vpop.f32.mrb[0].mxu0
      %v1695 = vadd.f32 %v1566, %v1694
      %v1696 = vpop.f32.mrb[0].mxu0
      %1697 = vmatprep.mubr.f32.mxu0 %v1600
      %1698 = vmatmul.mubr.f32.gmra.mrb[0].mxu0 %v1529
      %v1699 = vpop.f32.mrb[0].mxu0
      %v1700 = vadd.f32 %v1571, %v1699
      %v1701 = vpop.f32.mrb[0].mxu0
      %1702 = vmatprep.mubr.f32.mxu0 %v1603
      %1703 = vmatmul.mubr.f32.gmra.mrb[0].mxu0 %v1531
      %v1704 = vpop.f32.mrb[0].mxu0
      %v1705 = vadd.f32 %v1576, %v1704
      %v1706 = vpop.f32.mrb[0].mxu0
      %1707 = vmatprep.mubr.f32.mxu0 %v1606
      %1708 = vmatmul.mubr.f32.gmra.mrb[0].mxu0 %v1533
      %v1709 = vpop.f32.mrb[0].mxu0
      %v1710 = vadd.f32 %v1581, %v1709
      %v1711 = vpop.f32.mrb[0].mxu0
      %1712 = vdwg.mxu0
      %v1713 = vld [vmem:[%s15] sm:$0xff]
      %vm1714 = vcmask 64512
      %v1716 = vsel %vm1714, %v1675, 0
      %v1719 = vsel %vm1714, %v1680, 0
      %v1722 = vsel %vm1714, %v1685, 0
      %v1725 = vsel %vm1714, %v1690, 0
      %v1728 = vsel %vm1714, %v1695, 0
      %v1731 = vsel %vm1714, %v1700, 0
      %v1734 = vsel %vm1714, %v1705, 0
      %v1737 = vsel %vm1714, %v1710, 0
      %1739 = vmatprep.subr.mxu0 0.0
      %1740 = vmatpush1.msra.mxu0 %v1713
      %1741 = vmatprep.subr.mxu0 0.0
      %1742 = vmatpush1.msra.mxu0 0.0
      %1743 = vmatprep.subr.mxu0 0.0
      %1744 = vmatpush1.msra.mxu0 0.0
      %1745 = vmatprep.subr.mxu0 0.0
      %1746 = vmatpush1.msra.mxu0 0.0
      %1747 = vmatprep.subr.mxu0 0.0
      %1748 = vmatpush1.msra.mxu0 0.0
      %1749 = vmatprep.subr.mxu0 0.0
      %1750 = vmatpush1.msra.mxu0 0.0
      %1751 = vmatprep.subr.mxu0 0.0
      %1752 = vmatpush1.msra.mxu0 0.0
      %1753 = vmatprep.subr.mxu0 0.0
      %1754 = vmatpush1.msra.mxu0 0.0
      %1755 = vmatprep.subr.mxu0 0.0
      %1756 = vmatpush1.msra.mxu0 0.0
      %1757 = vmatprep.subr.mxu0 0.0
      %1758 = vmatpush1.msra.mxu0 0.0
      %1759 = vmatprep.subr.mxu0 0.0
      %1760 = vmatpush1.msra.mxu0 0.0
      %1761 = vmatprep.subr.mxu0 0.0
      %1762 = vmatpush1.msra.mxu0 0.0
      %1763 = vmatprep.subr.mxu0 0.0
      %1764 = vmatpush1.msra.mxu0 0.0
      %1765 = vmatprep.subr.mxu0 0.0
      %1766 = vmatpush1.msra.mxu0 0.0
      %1767 = vmatprep.subr.mxu0 0.0
      %1768 = vmatpush1.msra.mxu0 0.0
      %1769 = vmatprep.subr.mxu0 0.0
      %1770 = vmatpush1.msra.mxu0 0.0
      %1771 = vmatprep.subr.mxu0 0.0
      %1772 = vmatpush1.msra.mxu0 0.0
      %1773 = vmatprep.subr.mxu0 0.0
      %1774 = vmatpush1.msra.mxu0 0.0
      %1775 = vmatprep.subr.mxu0 0.0
      %1776 = vmatpush1.msra.mxu0 0.0
      %1777 = vmatprep.subr.mxu0 0.0
      %1778 = vmatpush1.msra.mxu0 0.0
      %1779 = vmatprep.subr.mxu0 0.0
      %1780 = vmatpush1.msra.mxu0 0.0
      %1781 = vmatprep.subr.mxu0 0.0
      %1782 = vmatpush1.msra.mxu0 0.0
      %1783 = vmatprep.subr.mxu0 0.0
      %1784 = vmatpush1.msra.mxu0 0.0
      %1785 = vmatprep.subr.mxu0 0.0
      %1786 = vmatpush1.msra.mxu0 0.0
      %1787 = vmatprep.subr.mxu0 0.0
      %1788 = vmatpush1.msra.mxu0 0.0
      %1789 = vmatprep.subr.mxu0 0.0
      %1790 = vmatpush1.msra.mxu0 0.0
      %1791 = vmatprep.subr.mxu0 0.0
      %1792 = vmatpush1.msra.mxu0 0.0
      %1793 = vmatprep.subr.mxu0 0.0
      %1794 = vmatpush1.msra.mxu0 0.0
      %1795 = vmatprep.subr.mxu0 0.0
      %1796 = vmatpush1.msra.mxu0 0.0
      %1797 = vmatprep.subr.mxu0 0.0
      %1798 = vmatpush1.msra.mxu0 0.0
      %1799 = vmatprep.subr.mxu0 0.0
      %1800 = vmatpush1.msra.mxu0 0.0
      %1801 = vmatprep.subr.mxu0 0.0
      %1802 = vmatpush1.msra.mxu0 0.0
      %1803 = vmatprep.mubr.f32.mxu0 0.0
      %1804 = vmatmul.mubr.f32.gmra.mrb[0].mxu0 %v1716
      %v1805 = vpop.f32.mrb[0].mxu0
      %v1806 = vadd.f32 0.0, %v1805
      %v1807 = vpop.f32.mrb[0].mxu0
      %1808 = vmatprep.mubr.f32.mxu0 0.0
      %1809 = vmatmul.mubr.f32.gmra.mrb[0].mxu0 %v1719
      %v1810 = vpop.f32.mrb[0].mxu0
      %v1811 = vadd.f32 0.0, %v1810
      %v1812 = vpop.f32.mrb[0].mxu0
      %1813 = vmatprep.mubr.f32.mxu0 0.0
      %1814 = vmatmul.mubr.f32.gmra.mrb[0].mxu0 %v1722
      %v1815 = vpop.f32.mrb[0].mxu0
      %v1816 = vadd.f32 0.0, %v1815
      %v1817 = vpop.f32.mrb[0].mxu0
      %1818 = vmatprep.mubr.f32.mxu0 0.0
      %1819 = vmatmul.mubr.f32.gmra.mrb[0].mxu0 %v1725
      %v1820 = vpop.f32.mrb[0].mxu0
      %v1821 = vadd.f32 0.0, %v1820
      %v1822 = vpop.f32.mrb[0].mxu0
      %1823 = vmatprep.mubr.f32.mxu0 0.0
      %1824 = vmatmul.mubr.f32.gmra.mrb[0].mxu0 %v1728
      %v1825 = vpop.f32.mrb[0].mxu0
      %v1826 = vadd.f32 0.0, %v1825
      %v1827 = vpop.f32.mrb[0].mxu0
      %1828 = vmatprep.mubr.f32.mxu0 0.0
      %1829 = vmatmul.mubr.f32.gmra.mrb[0].mxu0 %v1731
      %v1830 = vpop.f32.mrb[0].mxu0
      %v1831 = vadd.f32 0.0, %v1830
      %v1832 = vpop.f32.mrb[0].mxu0
      %1833 = vmatprep.mubr.f32.mxu0 0.0
      %1834 = vmatmul.mubr.f32.gmra.mrb[0].mxu0 %v1734
      %v1835 = vpop.f32.mrb[0].mxu0
      %v1836 = vadd.f32 0.0, %v1835
      %v1837 = vpop.f32.mrb[0].mxu0
      %1838 = vmatprep.mubr.f32.mxu0 0.0
      %1839 = vmatmul.mubr.f32.gmra.mrb[0].mxu0 %v1737
      %v1840 = vpop.f32.mrb[0].mxu0
      %v1841 = vadd.f32 0.0, %v1840
      %v1842 = vpop.f32.mrb[0].mxu0
      %1843 = vdwg.mxu0
      %v1844 = vld [vmem:[%s16] sm:$0xff]
      %1845 = vmatprep.subr.mxu0 0.0
      %1846 = vmatpush1.msra.mxu0 %v1844
      %1847 = vmatprep.subr.mxu0 0.0
      %1848 = vmatpush1.msra.mxu0 0.0
      %1849 = vmatprep.subr.mxu0 0.0
      %1850 = vmatpush1.msra.mxu0 0.0
      %1851 = vmatprep.subr.mxu0 0.0
      %1852 = vmatpush1.msra.mxu0 0.0
      %1853 = vmatprep.subr.mxu0 0.0
      %1854 = vmatpush1.msra.mxu0 0.0
      %1855 = vmatprep.subr.mxu0 0.0
      %1856 = vmatpush1.msra.mxu0 0.0
      %1857 = vmatprep.subr.mxu0 0.0
      %1858 = vmatpush1.msra.mxu0 0.0
      %1859 = vmatprep.subr.mxu0 0.0
      %1860 = vmatpush1.msra.mxu0 0.0
      %1861 = vmatprep.subr.mxu0 0.0
      %1862 = vmatpush1.msra.mxu0 0.0
      %1863 = vmatprep.subr.mxu0 0.0
      %1864 = vmatpush1.msra.mxu0 0.0
      %1865 = vmatprep.subr.mxu0 0.0
      %1866 = vmatpush1.msra.mxu0 0.0
      %1867 = vmatprep.subr.mxu0 0.0
      %1868 = vmatpush1.msra.mxu0 0.0
      %1869 = vmatprep.subr.mxu0 0.0
      %1870 = vmatpush1.msra.mxu0 0.0
      %1871 = vmatprep.subr.mxu0 0.0
      %1872 = vmatpush1.msra.mxu0 0.0
      %1873 = vmatprep.subr.mxu0 0.0
      %1874 = vmatpush1.msra.mxu0 0.0
      %1875 = vmatprep.subr.mxu0 0.0
      %1876 = vmatpush1.msra.mxu0 0.0
      %1877 = vmatprep.subr.mxu0 0.0
      %1878 = vmatpush1.msra.mxu0 0.0
      %1879 = vmatprep.subr.mxu0 0.0
      %1880 = vmatpush1.msra.mxu0 0.0
      %1881 = vmatprep.subr.mxu0 0.0
      %1882 = vmatpush1.msra.mxu0 0.0
      %1883 = vmatprep.subr.mxu0 0.0
      %1884 = vmatpush1.msra.mxu0 0.0
      %1885 = vmatprep.subr.mxu0 0.0
      %1886 = vmatpush1.msra.mxu0 0.0
      %1887 = vmatprep.subr.mxu0 0.0
      %1888 = vmatpush1.msra.mxu0 0.0
      %1889 = vmatprep.subr.mxu0 0.0
      %1890 = vmatpush1.msra.mxu0 0.0
      %1891 = vmatprep.subr.mxu0 0.0
      %1892 = vmatpush1.msra.mxu0 0.0
      %1893 = vmatprep.subr.mxu0 0.0
      %1894 = vmatpush1.msra.mxu0 0.0
      %1895 = vmatprep.subr.mxu0 0.0
      %1896 = vmatpush1.msra.mxu0 0.0
      %1897 = vmatprep.subr.mxu0 0.0
      %1898 = vmatpush1.msra.mxu0 0.0
      %1899 = vmatprep.subr.mxu0 0.0
      %1900 = vmatpush1.msra.mxu0 0.0
      %1901 = vmatprep.subr.mxu0 0.0
      %1902 = vmatpush1.msra.mxu0 0.0
      %1903 = vmatprep.subr.mxu0 0.0
      %1904 = vmatpush1.msra.mxu0 0.0
      %1905 = vmatprep.subr.mxu0 0.0
      %1906 = vmatpush1.msra.mxu0 0.0
      %1907 = vmatprep.subr.mxu0 0.0
      %1908 = vmatpush1.msra.mxu0 0.0
      %1909 = vmatprep.mubr.f32.mxu0 0.0
      %1910 = vmatmul.mubr.f32.gmra.mrb[0].mxu0 %v1716
      %v1911 = vpop.f32.mrb[0].mxu0
      %v1912 = vadd.f32 0.0, %v1911
      %v1913 = vpop.f32.mrb[0].mxu0
      %1914 = vmatprep.mubr.f32.mxu0 0.0
      %1915 = vmatmul.mubr.f32.gmra.mrb[0].mxu0 %v1719
      %v1916 = vpop.f32.mrb[0].mxu0
      %v1917 = vadd.f32 0.0, %v1916
      %v1918 = vpop.f32.mrb[0].mxu0
      %1919 = vmatprep.mubr.f32.mxu0 0.0
      %1920 = vmatmul.mubr.f32.gmra.mrb[0].mxu0 %v1722
      %v1921 = vpop.f32.mrb[0].mxu0
      %v1922 = vadd.f32 0.0, %v1921
      %v1923 = vpop.f32.mrb[0].mxu0
      %1924 = vmatprep.mubr.f32.mxu0 0.0
      %1925 = vmatmul.mubr.f32.gmra.mrb[0].mxu0 %v1725
      %v1926 = vpop.f32.mrb[0].mxu0
      %v1927 = vadd.f32 0.0, %v1926
      %v1928 = vpop.f32.mrb[0].mxu0
      %1929 = vmatprep.mubr.f32.mxu0 0.0
      %1930 = vmatmul.mubr.f32.gmra.mrb[0].mxu0 %v1728
      %v1931 = vpop.f32.mrb[0].mxu0
      %v1932 = vadd.f32 0.0, %v1931
      %v1933 = vpop.f32.mrb[0].mxu0
      %1934 = vmatprep.mubr.f32.mxu0 0.0
      %1935 = vmatmul.mubr.f32.gmra.mrb[0].mxu0 %v1731
      %v1936 = vpop.f32.mrb[0].mxu0
      %v1937 = vadd.f32 0.0, %v1936
      %v1938 = vpop.f32.mrb[0].mxu0
      %1939 = vmatprep.mubr.f32.mxu0 0.0
      %1940 = vmatmul.mubr.f32.gmra.mrb[0].mxu0 %v1734
      %v1941 = vpop.f32.mrb[0].mxu0
      %v1942 = vadd.f32 0.0, %v1941
      %v1943 = vpop.f32.mrb[0].mxu0
      %1944 = vmatprep.mubr.f32.mxu0 0.0
      %1945 = vmatmul.mubr.f32.gmra.mrb[0].mxu0 %v1737
      %v1946 = vpop.f32.mrb[0].mxu0
      %v1947 = vadd.f32 0.0, %v1946
      %v1948 = vpop.f32.mrb[0].mxu0
      %1949 = vdwg.mxu0
      %v1950 = vmax.f32 %v1806, %v1912
      %v1951 = vmax.f32 %v1811, %v1917
      %v1952 = vmax.f32 %v1816, %v1922
      %v1953 = vmax.f32 %v1821, %v1927
      %v1954 = vmax.f32 %v1826, %v1932
      %v1955 = vmax.f32 %v1831, %v1937
      %v1956 = vmax.f32 %v1836, %v1942
      %v1957 = vmax.f32 %v1841, %v1947
      %vm1958 = vcmp.ge.f32.partialorder %v1950, 0.0
      %vm1959 = vcmp.ge.f32.partialorder %v1951, 0.0
      %vm1960 = vcmp.ge.f32.partialorder %v1952, 0.0
      %vm1961 = vcmp.ge.f32.partialorder %v1953, 0.0
      %vm1962 = vcmp.ge.f32.partialorder %v1954, 0.0
      %vm1963 = vcmp.ge.f32.partialorder %v1955, 0.0
      %vm1964 = vcmp.ge.f32.partialorder %v1956, 0.0
      %vm1965 = vcmp.ge.f32.partialorder %v1957, 0.0
      %v1966 = vmul.f32 %v1950, 0.05
      %v1967 = vmul.f32 %v1951, 0.05
      %v1968 = vmul.f32 %v1952, 0.05
      %v1969 = vmul.f32 %v1953, 0.05
      %v1970 = vmul.f32 %v1954, 0.05
      %v1971 = vmul.f32 %v1955, 0.05
      %v1972 = vmul.f32 %v1956, 0.05
      %v1973 = vmul.f32 %v1957, 0.05
      %v1974 = vsel %vm1958, %v1950, %v1966
      %v1975 = vsel %vm1959, %v1951, %v1967
      %v1976 = vsel %vm1960, %v1952, %v1968
      %v1977 = vsel %vm1961, %v1953, %v1969
      %v1978 = vsel %vm1962, %v1954, %v1970
      %v1979 = vsel %vm1963, %v1955, %v1971
      %v1980 = vsel %vm1964, %v1956, %v1972
      %v1981 = vsel %vm1965, %v1957, %v1973
      %vm1982 = vcmask 31744
      %1983 = vst.msk [vmem:[%s542] sm:$0xff] %vm1982, %v1974
      %1984 = vst.msk [vmem:[%s542 + $0x8] sm:$0xff] %vm1982, %v1975
      %1985 = vst.msk [vmem:[%s542 + $0x10] sm:$0xff] %vm1982, %v1976
      %1986 = vst.msk [vmem:[%s542 + $0x18] sm:$0xff] %vm1982, %v1977
      %1987 = vst.msk [vmem:[%s542 + $0x20] sm:$0xff] %vm1982, %v1978
      %1988 = vst.msk [vmem:[%s542 + $0x28] sm:$0xff] %vm1982, %v1979
      %1989 = vst.msk [vmem:[%s542 + $0x30] sm:$0xff] %vm1982, %v1980
      %1990 = vst.msk [vmem:[%s542 + $0x38] sm:$0xff] %vm1982, %v1981
      %p1991 = scmp.lt.s32.totalorder %s28, 1
      %s1992 = scalar_select %p1991, %s28, 1
      %s1993 = smul.addr %s1992, 8
      %s1994 = smul.addr %s1993, 8
      %s1995 = scalar_lea.vmem %s17, %s1994
      // Predicated region
      $region89: #{tpu_custom_call.1} parent=87 // pred_check
        %p1996 = pneg %p408
      $region90: #{tpu_custom_call.1} parent=87 // pred_check_branch
        %1998 = sbr.rel (%p1996) target = $region92
      $region91: #{tpu_custom_call.1} parent=87 // pred_region
        _
      $region92: #{tpu_custom_call.1} parent=87 // pred_fallthru
        _
    $region88: #{tpu_custom_call.1} parent=5 // pred_fallthru
      _
    %p1999 = scmp.le.s32.totalorder 2, %s23
    // Predicated region
    $region93: #{tpu_custom_call.1} parent=5 // pred_check
      %p2000 = pneg %p1999
    $region94: #{tpu_custom_call.1} parent=5 // pred_check_branch
      %2002 = sbr.rel (%p2000) target = $region96
    $region95: #{tpu_custom_call.1} parent=5 // pred_region
      %s2003 = ssub.s32 %s23, 2
      // Predicated region
      $region97: #{tpu_custom_call.1} parent=95 // pred_check
        %p2004 = pneg %p414
      $region98: #{tpu_custom_call.1} parent=95 // pred_check_branch
        %2006 = sbr.rel (%p2004) target = $region100
      $region99: #{tpu_custom_call.1} parent=95 // pred_region
        %p2007 = scmp.lt.s32.totalorder %s29, 1
        %s2008 = scalar_select %p2007, %s29, 1
        %s2009 = smul.addr %s2008, 8
        %s2010 = smul.addr %s2009, 8
        %s2011 = scalar_lea.vmem %s17, %s2010
      $region100: #{tpu_custom_call.1} parent=95 // pred_fallthru
        _
    $region96: #{tpu_custom_call.1} parent=5 // pred_fallthru
      _
  $region6: #{tpu_custom_call.1} parent=0 // loop_footer
    %s27 = sadd.s32 1, %s23
  $region7: #{tpu_custom_call.1} parent=0 // loop_footer_branch
    %22 = sbr.rel target = $region3
  $region8: #{tpu_custom_call.1} parent=0 // loop_exit
    _

</llo_original>
